<compile_context>
chip_gen: v6e
topology: v6e:2x2x1
jax: 0.10.0
libtpu: 0.0.40
codegen_flags: <defaults>
</compile_context>

<pallas_src>
import functools
import math

import jax
import jax.numpy as jnp
from jax import lax
from jax.experimental import pallas as pl
from jax.experimental.pallas import tpu as pltpu

PARTIAL_ROTARY_FACTOR = 1.0                      # config.partial_rotary_factor
NEG = float(jnp.finfo(jnp.float16).min)          # torch.finfo(torch.float16).min


def _f32_dot(a, b, dims):
    """dot_general with f32 accumulation on the MXU."""
    return lax.dot_general(a, b, (dims, ((), ())), preferred_element_type=jnp.float32)


def _tile(n, preferred):
    if n <= preferred:
        return n
    if n % preferred == 0:
        return preferred
    return n  # TODO(synk): ragged tails would need masked tiles; fall back to one block


# --------------------------- kernel 1: fused QKV projection + RoPE ---------------------------
def qkv_rope_kernel(x_ref, wqT_ref, wkT_ref, wvT_ref, cos_ref, sin_ref,
                    q_ref, kc_ref, vc_ref, kbf_ref, vbf_ref,
                    *, num_heads, num_kv_heads, head_dim, inv_scale):
    ts = x_ref.shape[1]
    half = head_dim // 2

    xb = x_ref[0]                                      # [ts, H]  bf16
    # Full-width projections: near-peak MXU occupancy instead of per-head hd-wide dots.
    q = _f32_dot(xb, wqT_ref[...], ((1,), (0,)))       # [ts, H]
    k = _f32_dot(xb, wkT_ref[...], ((1,), (0,)))       # [ts, KV_H]
    v = _f32_dot(xb, wvT_ref[...], ((1,), (0,)))       # [ts, KV_H]

    # Fold 1/scale into q once (RoPE is linear), so kernel 2 never multiplies by it.
    q = q * inv_scale

    cos = cos_ref[0]                                   # [ts, hd] f32
    sin = sin_ref[0]
    lane = lax.broadcasted_iota(jnp.int32, (ts, head_dim), 1)
    sign = jnp.where(lane < half, -1.0, 1.0)           # rotate_half(t) == roll(t, half) * sign

    def rope(t):
        return t * cos + pltpu.roll(t, shift=half, axis=1) * sign * sin

    # Per-head RoPE + head-major writeback (hd=128 in production -> lane-aligned slices).
    for h in range(num_heads):
        qh = q[:, h * head_dim:(h + 1) * head_dim]
        q_ref[0, h] = rope(qh).astype(q_ref.dtype)
    for h in range(num_kv_heads):
        kh = rope(k[:, h * head_dim:(h + 1) * head_dim])
        vh = v[:, h * head_dim:(h + 1) * head_dim]
        kc_ref[0, h] = kh.astype(kc_ref.dtype)          # f32 cache (module contract)
        vc_ref[0, h] = vh.astype(vc_ref.dtype)
        kbf_ref[0, h] = kh.astype(kbf_ref.dtype)        # bf16 copy for the attention sweep
        vbf_ref[0, h] = vh.astype(vbf_ref.dtype)


# ------------------ kernel 2: flash attention (online softmax) + output projection ------------------
def flash_attn_oproj_kernel(q_ref, k_ref, v_ref, pad_ref, woT_ref, out_ref,
                            m_ref, l_ref, acc_ref,
                            *, n_rep, seq_len, total_len, use_cache):
    tq = q_ref.shape[2]
    tkv = k_ref.shape[2]

    g = pl.program_id(2)          # kv-head group (reduction for the o_proj accumulation)
    ki = pl.program_id(3)         # kv tile (innermost reduction)
    nki = pl.num_programs(3)

    # Zero the resident output block on its first visit (it is the accumulator across g, ki).
    @pl.when((g == 0) & (ki == 0))
    def _():
        out_ref[...] = jnp.zeros(out_ref.shape, out_ref.dtype)

    # Reset online-softmax state at the start of every KV sweep.
    @pl.when(ki == 0)
    def _():
        m_ref[...] = jnp.full(m_ref.shape, -jnp.inf, jnp.float32)
        l_ref[...] = jnp.zeros(l_ref.shape, jnp.float32)
        acc_ref[...] = jnp.zeros(acc_ref.shape, jnp.float32)

    k = k_ref[0, 0]                                     # [tkv, hd] bf16
    v = v_ref[0, 0]                                     # [tkv, hd] bf16

    # Additive mask built in-kernel: padding row + causal iota compare (no [B,S,T] tensor).
    bias = pad_ref[0]                                   # [1, tkv] f32 (0 or f16-min)
    if not use_cache:
        rows = lax.broadcasted_iota(jnp.int32, (tq, tkv), 0) + pl.program_id(1) * tq
        cols = lax.broadcasted_iota(jnp.int32, (tq, tkv), 1) + ki * tkv
        bias = bias + jnp.where(cols <= rows + (total_len - seq_len), 0.0, NEG)

    # GQA: one resident K/V tile serves the n_rep query heads of this group.
    # n_rep is small (1-8), so a static loop keeps codegen simple without blowing live ranges.
    for r in range(n_rep):
        qh = q_ref[0, r]                                                # bf16, 1/scale pre-folded
        s = _f32_dot(qh, k, ((1,), (1,))) + bias                        # [tq, tkv] f32
        m_prev = m_ref[r]
        m_new = jnp.maximum(m_prev, jnp.max(s, axis=-1, keepdims=True))
        alpha = jnp.exp(m_prev - m_new)
        p = jnp.exp(s - m_new)
        l_ref[r] = alpha * l_ref[r] + jnp.sum(p, axis=-1, keepdims=True)
        acc_ref[r] = alpha * acc_ref[r] + _f32_dot(p.astype(jnp.bfloat16), v, ((1,), (0,)))
        m_ref[r] = m_new

    # Finalize this kv-head group: deferred normalization (EUP reciprocal) + o_proj slice,
    # accumulated into the resident output block.
    @pl.when(ki == nki - 1)
    def _():
        contrib = jnp.zeros((tq, out_ref.shape[2]), jnp.float32)
        for r in range(n_rep):
            attn_h = acc_ref[r] * pl.reciprocal(l_ref[r], approx=True)  # [tq, hd]
            contrib = contrib + _f32_dot(attn_h.astype(jnp.bfloat16), woT_ref[r], ((1,), (0,)))
        out_ref[0] = out_ref[0] + contrib.astype(out_ref.dtype)


# --------------------------------------- wrapper ---------------------------------------
def self_attention_forward(use_cache, x, position_ids, attention_mask,
                           cos, sin, k_cache, v_cache,
                           wq, wk, wv, wo,
                           num_heads, num_kv_heads, scale_type,
                           *, q_tile=128, kv_tile=256, proj_tile=256):
    B, S, H = x.shape
    head_dim = H // num_heads
    kv_h = num_kv_heads * head_dim
    n_rep = num_heads // num_kv_heads
    T = attention_mask.shape[1]

    # TODO(synk): decode path (non-empty incoming kv cache) not implemented in-kernel.
    assert k_cache.shape[2] == 0 and v_cache.shape[2] == 0
    assert T == S + k_cache.shape[2]
    assert num_heads % num_kv_heads == 0 and head_dim % 2 == 0

    if scale_type == 'HeadDim':
        scale = float(head_dim)
    elif scale_type == 'SquareRootHeadDim':
        scale = float(math.sqrt(head_dim))
    else:
        raise ValueError(f'Unknown scale type {scale_type}')

    ts = _tile(S, proj_tile)
    tq = _tile(S, q_tile)
    tkv = _tile(T, kv_tile)

    # ---- glue (cheap): weight layouts, bf16 casts, rope-table gather, thin padding bias ----
    wqT = wq.T.astype(jnp.bfloat16)                                    # [H, H]
    wkT = wk.T.astype(jnp.bfloat16)                                    # [H, KV_H]
    wvT = wv.T.astype(jnp.bfloat16)                                    # [H, KV_H]
    woT_heads = wo.T.reshape(num_heads, head_dim, H).astype(jnp.bfloat16)   # [NH, hd, H]
    x_bf = x.astype(jnp.bfloat16)
    cos_g = cos[:, :head_dim][position_ids].astype(jnp.float32)        # [B, S, hd]
    sin_g = sin[:, :head_dim][position_ids].astype(jnp.float32)

    inv = 1.0 - attention_mask.astype(jnp.float32)
    pad_bias = jnp.where(inv != 0.0, NEG, inv)[:, None, :]             # [B, 1, T]

    vmem_limit = 48 * 1024 * 1024   # leaves headroom below v7x's 64 MiB physical VMEM

    # ---------------- kernel 1: QKV projection + RoPE ----------------
    k1 = functools.partial(qkv_rope_kernel, num_heads=num_heads,
                           num_kv_heads=num_kv_heads, head_dim=head_dim,
                           inv_scale=1.0 / scale)
    q_h, kc, vc, kbf, vbf = pl.pallas_call(
        k1,
        grid=(B, S // ts),
        in_specs=[
            pl.BlockSpec((1, ts, H), lambda b, si: (b, si, 0)),
            pl.BlockSpec((H, H), lambda b, si: (0, 0)),
            pl.BlockSpec((H, kv_h), lambda b, si: (0, 0)),
            pl.BlockSpec((H, kv_h), lambda b, si: (0, 0)),
            pl.BlockSpec((1, ts, head_dim), lambda b, si: (b, si, 0)),
            pl.BlockSpec((1, ts, head_dim), lambda b, si: (b, si, 0)),
        ],
        out_specs=(
            pl.BlockSpec((1, num_heads, ts, head_dim), lambda b, si: (b, 0, si, 0)),
            pl.BlockSpec((1, num_kv_heads, ts, head_dim), lambda b, si: (b, 0, si, 0)),
            pl.BlockSpec((1, num_kv_heads, ts, head_dim), lambda b, si: (b, 0, si, 0)),
            pl.BlockSpec((1, num_kv_heads, ts, head_dim), lambda b, si: (b, 0, si, 0)),
            pl.BlockSpec((1, num_kv_heads, ts, head_dim), lambda b, si: (b, 0, si, 0)),
        ),
        out_shape=(
            jax.ShapeDtypeStruct((B, num_heads, S, head_dim), jnp.bfloat16),
            jax.ShapeDtypeStruct((B, num_kv_heads, S, head_dim), jnp.float32),
            jax.ShapeDtypeStruct((B, num_kv_heads, S, head_dim), jnp.float32),
            jax.ShapeDtypeStruct((B, num_kv_heads, S, head_dim), jnp.bfloat16),
            jax.ShapeDtypeStruct((B, num_kv_heads, S, head_dim), jnp.bfloat16),
        ),
        compiler_params=pltpu.CompilerParams(
            dimension_semantics=("parallel", "parallel"),
            vmem_limit_bytes=vmem_limit),
    )(x_bf, wqT, wkT, wvT, cos_g, sin_g)

    # ---------------- kernel 2: flash attention + o_proj ----------------
    k2 = functools.partial(flash_attn_oproj_kernel, n_rep=n_rep, seq_len=S,
                           total_len=T, use_cache=bool(use_cache))
    out = pl.pallas_call(
        k2,
        grid=(B, S // tq, num_kv_heads, T // tkv),
        in_specs=[
            pl.BlockSpec((1, n_rep, tq, head_dim), lambda b, qi, g, ki: (b, g, qi, 0)),
            pl.BlockSpec((1, 1, tkv, head_dim), lambda b, qi, g, ki: (b, g, ki, 0)),
            pl.BlockSpec((1, 1, tkv, head_dim), lambda b, qi, g, ki: (b, g, ki, 0)),
            pl.BlockSpec((1, 1, tkv), lambda b, qi, g, ki: (b, 0, ki)),
            pl.BlockSpec((n_rep, head_dim, H), lambda b, qi, g, ki: (g, 0, 0)),
        ],
        out_specs=pl.BlockSpec((1, tq, H), lambda b, qi, g, ki: (b, qi, 0)),
        out_shape=jax.ShapeDtypeStruct((B, S, H), x.dtype),
        scratch_shapes=[
            pltpu.VMEM((n_rep, tq, 1), jnp.float32),        # running max m
            pltpu.VMEM((n_rep, tq, 1), jnp.float32),        # running sum l
            pltpu.VMEM((n_rep, tq, head_dim), jnp.float32), # unnormalized acc
        ],
        compiler_params=pltpu.CompilerParams(
            dimension_semantics=("parallel", "parallel", "arbitrary", "arbitrary"),
            vmem_limit_bytes=vmem_limit),
    )(q_h, kbf, vbf, pad_bias, woT_heads)

    return out, kc, vc


# ----------------------------- pure-JAX reference -----------------------------
def _rotate_half(t):
    h = t.shape[-1] // 2
    return jnp.concatenate([-t[..., h:], t[..., :h]], axis=-1)


def reference_forward(use_cache, x, position_ids, attention_mask, cos, sin,
                      k_cache, v_cache, wq, wk, wv, wo,
                      num_heads, num_kv_heads, scale_type):
    B, S, H = x.shape
    hd = H // num_heads
    scale = float(hd) if scale_type == 'HeadDim' else float(math.sqrt(hd))
    q = x @ wq.T
    k = x @ wk.T
    v = x @ wv.T
    q = q.reshape(B, S, num_heads, hd).transpose(0, 2, 1, 3)
    k = k.reshape(B, S, num_kv_heads, hd).transpose(0, 2, 1, 3)
    v = v.reshape(B, S, num_kv_heads, hd).transpose(0, 2, 1, 3)
    cos_g = cos[:, :hd][position_ids][:, None]
    sin_g = sin[:, :hd][position_ids][:, None]
    q = q * cos_g + _rotate_half(q) * sin_g
    k = k * cos_g + _rotate_half(k) * sin_g
    kc = jnp.concatenate([k_cache, k], axis=2)
    vc = jnp.concatenate([v_cache, v], axis=2)
    n_rep = num_heads // num_kv_heads
    key = jnp.repeat(kc, n_rep, axis=1)
    val = jnp.repeat(vc, n_rep, axis=1)
    score = jnp.einsum('bhqd,bhkd->bhqk', q, key) / scale
    T = attention_mask.shape[1]
    expanded = jnp.broadcast_to(attention_mask[:, None, None, :], (B, 1, S, T)).astype(jnp.float32)
    inv = 1.0 - expanded
    ms = jnp.where(inv != 0.0, NEG, inv)
    if not use_cache:
        causal = jnp.tril(jnp.ones((B, 1, S, T), jnp.float32), k=T - S)
        inv_c = 1.0 - causal
        ms = ms + jnp.where(inv_c != 0.0, NEG, inv_c)
    prob = jax.nn.softmax(score + ms, axis=-1)
    attn = jnp.einsum('bhqk,bhkd->bhqd', prob, val)
    attn = attn.transpose(0, 2, 1, 3).reshape(B, S, H)
    return attn @ wo.T, kc, vc


# ------------------------------------ main ------------------------------------
if __name__ == "__main__":
    B, S, H = 2, 8, 32
    NUM_HEADS, NUM_KV_HEADS = 4, 2
    HEAD_DIM = H // NUM_HEADS
    KV_H = NUM_KV_HEADS * HEAD_DIM
    MAX_POS = 16
    SCALE_TYPE = 'SquareRootHeadDim'
    USE_CACHE = False

    key = jax.random.PRNGKey(0)
    kx, kq, kk, kv, ko = jax.random.split(key, 5)
    bound = 1.0 / math.sqrt(H)
    x = jax.random.normal(kx, (B, S, H), jnp.float32)
    wq = jax.random.uniform(kq, (H, H), jnp.float32, -bound, bound)
    wk = jax.random.uniform(kk, (KV_H, H), jnp.float32, -bound, bound)
    wv = jax.random.uniform(kv, (KV_H, H), jnp.float32, -bound, bound)
    wo = jax.random.uniform(ko, (H, H), jnp.float32, -bound, bound)

    # rope tables
    inv_freq = 1.0 / (10000.0 ** (jnp.arange(0, HEAD_DIM, 2, dtype=jnp.float32) / HEAD_DIM))
    t = jnp.arange(MAX_POS, dtype=jnp.float32)
    freqs = jnp.outer(t, inv_freq)
    emb = jnp.concatenate([freqs, freqs], axis=-1)     # [MAX_POS, HEAD_DIM]
    cos = jnp.cos(emb)
    sin = jnp.sin(emb)

    position_ids = jnp.broadcast_to(jnp.arange(S, dtype=jnp.int32)[None, :], (B, S))
    attention_mask = jnp.ones((B, S), jnp.float32).at[1, -2:].set(0.0)   # pad last 2 of batch 1
    k_cache = jnp.zeros((B, NUM_KV_HEADS, 0, HEAD_DIM), jnp.float32)
    v_cache = jnp.zeros((B, NUM_KV_HEADS, 0, HEAD_DIM), jnp.float32)

    out, kc, vc = self_attention_forward(
        USE_CACHE, x, position_ids, attention_mask, cos, sin, k_cache, v_cache,
        wq, wk, wv, wo, NUM_HEADS, NUM_KV_HEADS, SCALE_TYPE)
    jax.block_until_ready((out, kc, vc))

    ref_out, ref_kc, ref_vc = reference_forward(
        USE_CACHE, x, position_ids, attention_mask, cos, sin, k_cache, v_cache,
        wq, wk, wv, wo, NUM_HEADS, NUM_KV_HEADS, SCALE_TYPE)

    # bf16 matmuls with f32 accumulation + approx reciprocal -> slightly looser tolerance
    assert jnp.allclose(kc, ref_kc, atol=2e-2, rtol=2e-2), "k_cache mismatch"
    assert jnp.allclose(vc, ref_vc, atol=2e-2, rtol=2e-2), "v_cache mismatch"
    assert jnp.allclose(out, ref_out, atol=3e-2, rtol=3e-2), "output mismatch"
    print("KERNEL_OK")
</pallas_src>

<mosaic_0001>
module attributes {stable_mosaic.version = 11 : i64} {
  func.func @qkv_rope_kernel(%arg0: i32, %arg1: i32, %arg2: memref<1x8x32xbf16, #tpu.memory_space<vmem>>, %arg3: memref<32x32xbf16, #tpu.memory_space<vmem>>, %arg4: memref<32x16xbf16, #tpu.memory_space<vmem>>, %arg5: memref<32x16xbf16, #tpu.memory_space<vmem>>, %arg6: memref<1x8x8xf32, #tpu.memory_space<vmem>>, %arg7: memref<1x8x8xf32, #tpu.memory_space<vmem>>, %arg8: memref<1x4x8x8xbf16, #tpu.memory_space<vmem>>, %arg9: memref<1x2x8x8xf32, #tpu.memory_space<vmem>>, %arg10: memref<1x2x8x8xf32, #tpu.memory_space<vmem>>, %arg11: memref<1x2x8x8xbf16, #tpu.memory_space<vmem>>, %arg12: memref<1x2x8x8xbf16, #tpu.memory_space<vmem>>) attributes {dimension_semantics = [#tpu.dimension_semantics<parallel>, #tpu.dimension_semantics<parallel>], iteration_bounds = array<i64: 2, 1>, scalar_prefetch = 0 : i64, scratch_operands = 0 : i64, tpu.core_type = #tpu.core_type<tc>, window_params = [{transform_indices = @transform_0, window_bounds = array<i64: 1, 8, 32>}, {pipeline_mode = #tpu.pipeline_mode<synchronous>, transform_indices = @transform_1, window_bounds = array<i64: 32, 32>}, {pipeline_mode = #tpu.pipeline_mode<synchronous>, transform_indices = @transform_2, window_bounds = array<i64: 32, 16>}, {pipeline_mode = #tpu.pipeline_mode<synchronous>, transform_indices = @transform_3, window_bounds = array<i64: 32, 16>}, {transform_indices = @transform_4, window_bounds = array<i64: 1, 8, 8>}, {transform_indices = @transform_5, window_bounds = array<i64: 1, 8, 8>}, {transform_indices = @transform_6, window_bounds = array<i64: 1, 4, 8, 8>}, {transform_indices = @transform_7, window_bounds = array<i64: 1, 2, 8, 8>}, {transform_indices = @transform_8, window_bounds = array<i64: 1, 2, 8, 8>}, {transform_indices = @transform_9, window_bounds = array<i64: 1, 2, 8, 8>}, {transform_indices = @transform_10, window_bounds = array<i64: 1, 2, 8, 8>}]} {
    %c0 = arith.constant 0 : index
    %c0_0 = arith.constant 0 : index
    %c0_1 = arith.constant 0 : index
    %0 = vector.load %arg2[%c0, %c0_0, %c0_1] : memref<1x8x32xbf16, #tpu.memory_space<vmem>>, vector<1x8x32xbf16>
    %1 = vector.shape_cast %0 : vector<1x8x32xbf16> to vector<8x32xbf16>
    %c0_2 = arith.constant 0 : index
    %c0_3 = arith.constant 0 : index
    %2 = vector.load %arg3[%c0_2, %c0_3] : memref<32x32xbf16, #tpu.memory_space<vmem>>, vector<32x32xbf16>
    %cst = arith.constant dense<0.000000e+00> : vector<8x32xf32>
    %3 = tpu.matmul %1, %2, %cst {dimension_numbers = #tpu.dot_dimension_numbers<[1], [0], [0], [1], [0, 0, 1, 1], [], []>} : vector<8x32xbf16>, vector<32x32xbf16>, vector<8x32xf32> -> vector<8x32xf32>
    %c0_4 = arith.constant 0 : index
    %c0_5 = arith.constant 0 : index
    %4 = vector.load %arg4[%c0_4, %c0_5] : memref<32x16xbf16, #tpu.memory_space<vmem>>, vector<32x16xbf16>
    %cst_6 = arith.constant dense<0.000000e+00> : vector<8x16xf32>
    %5 = tpu.matmul %1, %4, %cst_6 {dimension_numbers = #tpu.dot_dimension_numbers<[1], [0], [0], [1], [0, 0, 1, 1], [], []>} : vector<8x32xbf16>, vector<32x16xbf16>, vector<8x16xf32> -> vector<8x16xf32>
    %c0_7 = arith.constant 0 : index
    %c0_8 = arith.constant 0 : index
    %6 = vector.load %arg5[%c0_7, %c0_8] : memref<32x16xbf16, #tpu.memory_space<vmem>>, vector<32x16xbf16>
    %cst_9 = arith.constant dense<0.000000e+00> : vector<8x16xf32>
    %7 = tpu.matmul %1, %6, %cst_9 {dimension_numbers = #tpu.dot_dimension_numbers<[1], [0], [0], [1], [0, 0, 1, 1], [], []>} : vector<8x32xbf16>, vector<32x16xbf16>, vector<8x16xf32> -> vector<8x16xf32>
    %cst_10 = arith.constant 0.353553385 : f32
    %8 = vector.broadcast %cst_10 : f32 to vector<8x32xf32>
    %9 = arith.mulf %3, %8 : vector<8x32xf32>
    %c0_11 = arith.constant 0 : index
    %c0_12 = arith.constant 0 : index
    %c0_13 = arith.constant 0 : index
    %10 = vector.load %arg6[%c0_11, %c0_12, %c0_13] : memref<1x8x8xf32, #tpu.memory_space<vmem>>, vector<1x8x8xf32>
    %11 = vector.shape_cast %10 : vector<1x8x8xf32> to vector<8x8xf32>
    %c0_14 = arith.constant 0 : index
    %c0_15 = arith.constant 0 : index
    %c0_16 = arith.constant 0 : index
    %12 = vector.load %arg7[%c0_14, %c0_15, %c0_16] : memref<1x8x8xf32, #tpu.memory_space<vmem>>, vector<1x8x8xf32>
    %13 = vector.shape_cast %12 : vector<1x8x8xf32> to vector<8x8xf32>
    %14 = tpu.iota {dimensions = array<i32: 1>} : vector<8x8xi32>
    %c4_i32 = arith.constant 4 : i32
    %15 = vector.broadcast %c4_i32 : i32 to vector<8x8xi32>
    %16 = arith.cmpi slt, %14, %15 : vector<8x8xi32>
    %cst_17 = arith.constant -1.000000e+00 : f32
    %cst_18 = arith.constant 1.000000e+00 : f32
    %17 = vector.broadcast %cst_17 : f32 to vector<8x8xf32>
    %18 = vector.broadcast %cst_18 : f32 to vector<8x8xf32>
    %19 = arith.select %16, %17, %18 : vector<8x8xi1>, vector<8x8xf32>
    %20 = vector.extract_strided_slice %9 {offsets = [0, 0], sizes = [8, 8], strides = [1, 1]} : vector<8x32xf32> to vector<8x8xf32>
    %21 = arith.mulf %20, %11 : vector<8x8xf32>
    %c4_i32_19 = arith.constant 4 : i32
    %22 = tpu.dynamic_rotate %20 by %c4_i32_19 dim 1 : vector<8x8xf32>, i32 -> vector<8x8xf32>
    %23 = arith.mulf %22, %19 : vector<8x8xf32>
    %24 = arith.mulf %23, %13 : vector<8x8xf32>
    %25 = arith.addf %21, %24 : vector<8x8xf32>
    %26 = arith.truncf %25 : vector<8x8xf32> to vector<8x8xbf16>
    %c0_20 = arith.constant 0 : index
    %c0_21 = arith.constant 0 : index
    %c0_22 = arith.constant 0 : index
    %c0_23 = arith.constant 0 : index
    %27 = vector.load %arg8[%c0_20, %c0_21, %c0_22, %c0_23] : memref<1x4x8x8xbf16, #tpu.memory_space<vmem>>, vector<1x1x8x8xbf16>
    %28 = vector.shape_cast %27 : vector<1x1x8x8xbf16> to vector<8x8xbf16>
    %29 = vector.shape_cast %26 : vector<8x8xbf16> to vector<1x1x8x8xbf16>
    tpu.vector_store %arg8[%c0_20, %c0_21, %c0_22, %c0_23], %29 {strides = array<i32>} : memref<1x4x8x8xbf16, #tpu.memory_space<vmem>>, vector<1x1x8x8xbf16>,
    %30 = vector.extract_strided_slice %9 {offsets = [0, 8], sizes = [8, 8], strides = [1, 1]} : vector<8x32xf32> to vector<8x8xf32>
    %31 = arith.mulf %30, %11 : vector<8x8xf32>
    %c4_i32_24 = arith.constant 4 : i32
    %32 = tpu.dynamic_rotate %30 by %c4_i32_24 dim 1 : vector<8x8xf32>, i32 -> vector<8x8xf32>
    %33 = arith.mulf %32, %19 : vector<8x8xf32>
    %34 = arith.mulf %33, %13 : vector<8x8xf32>
    %35 = arith.addf %31, %34 : vector<8x8xf32>
    %36 = arith.truncf %35 : vector<8x8xf32> to vector<8x8xbf16>
    %c0_25 = arith.constant 0 : index
    %c1 = arith.constant 1 : index
    %c0_26 = arith.constant 0 : index
    %c0_27 = arith.constant 0 : index
    %37 = vector.load %arg8[%c0_25, %c1, %c0_26, %c0_27] : memref<1x4x8x8xbf16, #tpu.memory_space<vmem>>, vector<1x1x8x8xbf16>
    %38 = vector.shape_cast %37 : vector<1x1x8x8xbf16> to vector<8x8xbf16>
    %39 = vector.shape_cast %36 : vector<8x8xbf16> to vector<1x1x8x8xbf16>
    tpu.vector_store %arg8[%c0_25, %c1, %c0_26, %c0_27], %39 {strides = array<i32>} : memref<1x4x8x8xbf16, #tpu.memory_space<vmem>>, vector<1x1x8x8xbf16>,
    %40 = vector.extract_strided_slice %9 {offsets = [0, 16], sizes = [8, 8], strides = [1, 1]} : vector<8x32xf32> to vector<8x8xf32>
    %41 = arith.mulf %40, %11 : vector<8x8xf32>
    %c4_i32_28 = arith.constant 4 : i32
    %42 = tpu.dynamic_rotate %40 by %c4_i32_28 dim 1 : vector<8x8xf32>, i32 -> vector<8x8xf32>
    %43 = arith.mulf %42, %19 : vector<8x8xf32>
    %44 = arith.mulf %43, %13 : vector<8x8xf32>
    %45 = arith.addf %41, %44 : vector<8x8xf32>
    %46 = arith.truncf %45 : vector<8x8xf32> to vector<8x8xbf16>
    %c0_29 = arith.constant 0 : index
    %c2 = arith.constant 2 : index
    %c0_30 = arith.constant 0 : index
    %c0_31 = arith.constant 0 : index
    %47 = vector.load %arg8[%c0_29, %c2, %c0_30, %c0_31] : memref<1x4x8x8xbf16, #tpu.memory_space<vmem>>, vector<1x1x8x8xbf16>
    %48 = vector.shape_cast %47 : vector<1x1x8x8xbf16> to vector<8x8xbf16>
    %49 = vector.shape_cast %46 : vector<8x8xbf16> to vector<1x1x8x8xbf16>
    tpu.vector_store %arg8[%c0_29, %c2, %c0_30, %c0_31], %49 {strides = array<i32>} : memref<1x4x8x8xbf16, #tpu.memory_space<vmem>>, vector<1x1x8x8xbf16>,
    %50 = vector.extract_strided_slice %9 {offsets = [0, 24], sizes = [8, 8], strides = [1, 1]} : vector<8x32xf32> to vector<8x8xf32>
    %51 = arith.mulf %50, %11 : vector<8x8xf32>
    %c4_i32_32 = arith.constant 4 : i32
    %52 = tpu.dynamic_rotate %50 by %c4_i32_32 dim 1 : vector<8x8xf32>, i32 -> vector<8x8xf32>
    %53 = arith.mulf %52, %19 : vector<8x8xf32>
    %54 = arith.mulf %53, %13 : vector<8x8xf32>
    %55 = arith.addf %51, %54 : vector<8x8xf32>
    %56 = arith.truncf %55 : vector<8x8xf32> to vector<8x8xbf16>
    %c0_33 = arith.constant 0 : index
    %c3 = arith.constant 3 : index
    %c0_34 = arith.constant 0 : index
    %c0_35 = arith.constant 0 : index
    %57 = vector.load %arg8[%c0_33, %c3, %c0_34, %c0_35] : memref<1x4x8x8xbf16, #tpu.memory_space<vmem>>, vector<1x1x8x8xbf16>
    %58 = vector.shape_cast %57 : vector<1x1x8x8xbf16> to vector<8x8xbf16>
    %59 = vector.shape_cast %56 : vector<8x8xbf16> to vector<1x1x8x8xbf16>
    tpu.vector_store %arg8[%c0_33, %c3, %c0_34, %c0_35], %59 {strides = array<i32>} : memref<1x4x8x8xbf16, #tpu.memory_space<vmem>>, vector<1x1x8x8xbf16>,
    %60 = vector.extract_strided_slice %5 {offsets = [0, 0], sizes = [8, 8], strides = [1, 1]} : vector<8x16xf32> to vector<8x8xf32>
    %61 = arith.mulf %60, %11 : vector<8x8xf32>
    %c4_i32_36 = arith.constant 4 : i32
    %62 = tpu.dynamic_rotate %60 by %c4_i32_36 dim 1 : vector<8x8xf32>, i32 -> vector<8x8xf32>
    %63 = arith.mulf %62, %19 : vector<8x8xf32>
    %64 = arith.mulf %63, %13 : vector<8x8xf32>
    %65 = arith.addf %61, %64 : vector<8x8xf32>
    %66 = vector.extract_strided_slice %7 {offsets = [0, 0], sizes = [8, 8], strides = [1, 1]} : vector<8x16xf32> to vector<8x8xf32>
    %c0_37 = arith.constant 0 : index
    %c0_38 = arith.constant 0 : index
    %c0_39 = arith.constant 0 : index
    %c0_40 = arith.constant 0 : index
    %67 = vector.load %arg9[%c0_37, %c0_38, %c0_39, %c0_40] : memref<1x2x8x8xf32, #tpu.memory_space<vmem>>, vector<1x1x8x8xf32>
    %68 = vector.shape_cast %67 : vector<1x1x8x8xf32> to vector<8x8xf32>
    %69 = vector.shape_cast %65 : vector<8x8xf32> to vector<1x1x8x8xf32>
    tpu.vector_store %arg9[%c0_37, %c0_38, %c0_39, %c0_40], %69 {strides = array<i32>} : memref<1x2x8x8xf32, #tpu.memory_space<vmem>>, vector<1x1x8x8xf32>,
    %c0_41 = arith.constant 0 : index
    %c0_42 = arith.constant 0 : index
    %c0_43 = arith.constant 0 : index
    %c0_44 = arith.constant 0 : index
    %70 = vector.load %arg10[%c0_41, %c0_42, %c0_43, %c0_44] : memref<1x2x8x8xf32, #tpu.memory_space<vmem>>, vector<1x1x8x8xf32>
    %71 = vector.shape_cast %70 : vector<1x1x8x8xf32> to vector<8x8xf32>
    %72 = vector.shape_cast %66 : vector<8x8xf32> to vector<1x1x8x8xf32>
    tpu.vector_store %arg10[%c0_41, %c0_42, %c0_43, %c0_44], %72 {strides = array<i32>} : memref<1x2x8x8xf32, #tpu.memory_space<vmem>>, vector<1x1x8x8xf32>,
    %73 = arith.truncf %65 : vector<8x8xf32> to vector<8x8xbf16>
    %c0_45 = arith.constant 0 : index
    %c0_46 = arith.constant 0 : index
    %c0_47 = arith.constant 0 : index
    %c0_48 = arith.constant 0 : index
    %74 = vector.load %arg11[%c0_45, %c0_46, %c0_47, %c0_48] : memref<1x2x8x8xbf16, #tpu.memory_space<vmem>>, vector<1x1x8x8xbf16>
    %75 = vector.shape_cast %74 : vector<1x1x8x8xbf16> to vector<8x8xbf16>
    %76 = vector.shape_cast %73 : vector<8x8xbf16> to vector<1x1x8x8xbf16>
    tpu.vector_store %arg11[%c0_45, %c0_46, %c0_47, %c0_48], %76 {strides = array<i32>} : memref<1x2x8x8xbf16, #tpu.memory_space<vmem>>, vector<1x1x8x8xbf16>,
    %77 = arith.truncf %66 : vector<8x8xf32> to vector<8x8xbf16>
    %c0_49 = arith.constant 0 : index
    %c0_50 = arith.constant 0 : index
    %c0_51 = arith.constant 0 : index
    %c0_52 = arith.constant 0 : index
    %78 = vector.load %arg12[%c0_49, %c0_50, %c0_51, %c0_52] : memref<1x2x8x8xbf16, #tpu.memory_space<vmem>>, vector<1x1x8x8xbf16>
    %79 = vector.shape_cast %78 : vector<1x1x8x8xbf16> to vector<8x8xbf16>
    %80 = vector.shape_cast %77 : vector<8x8xbf16> to vector<1x1x8x8xbf16>
    tpu.vector_store %arg12[%c0_49, %c0_50, %c0_51, %c0_52], %80 {strides = array<i32>} : memref<1x2x8x8xbf16, #tpu.memory_space<vmem>>, vector<1x1x8x8xbf16>,
    %81 = vector.extract_strided_slice %5 {offsets = [0, 8], sizes = [8, 8], strides = [1, 1]} : vector<8x16xf32> to vector<8x8xf32>
    %82 = arith.mulf %81, %11 : vector<8x8xf32>
    %c4_i32_53 = arith.constant 4 : i32
    %83 = tpu.dynamic_rotate %81 by %c4_i32_53 dim 1 : vector<8x8xf32>, i32 -> vector<8x8xf32>
    %84 = arith.mulf %83, %19 : vector<8x8xf32>
    %85 = arith.mulf %84, %13 : vector<8x8xf32>
    %86 = arith.addf %82, %85 : vector<8x8xf32>
    %87 = vector.extract_strided_slice %7 {offsets = [0, 8], sizes = [8, 8], strides = [1, 1]} : vector<8x16xf32> to vector<8x8xf32>
    %c0_54 = arith.constant 0 : index
    %c1_55 = arith.constant 1 : index
    %c0_56 = arith.constant 0 : index
    %c0_57 = arith.constant 0 : index
    %88 = vector.load %arg9[%c0_54, %c1_55, %c0_56, %c0_57] : memref<1x2x8x8xf32, #tpu.memory_space<vmem>>, vector<1x1x8x8xf32>
    %89 = vector.shape_cast %88 : vector<1x1x8x8xf32> to vector<8x8xf32>
    %90 = vector.shape_cast %86 : vector<8x8xf32> to vector<1x1x8x8xf32>
    tpu.vector_store %arg9[%c0_54, %c1_55, %c0_56, %c0_57], %90 {strides = array<i32>} : memref<1x2x8x8xf32, #tpu.memory_space<vmem>>, vector<1x1x8x8xf32>,
    %c0_58 = arith.constant 0 : index
    %c1_59 = arith.constant 1 : index
    %c0_60 = arith.constant 0 : index
    %c0_61 = arith.constant 0 : index
    %91 = vector.load %arg10[%c0_58, %c1_59, %c0_60, %c0_61] : memref<1x2x8x8xf32, #tpu.memory_space<vmem>>, vector<1x1x8x8xf32>
    %92 = vector.shape_cast %91 : vector<1x1x8x8xf32> to vector<8x8xf32>
    %93 = vector.shape_cast %87 : vector<8x8xf32> to vector<1x1x8x8xf32>
    tpu.vector_store %arg10[%c0_58, %c1_59, %c0_60, %c0_61], %93 {strides = array<i32>} : memref<1x2x8x8xf32, #tpu.memory_space<vmem>>, vector<1x1x8x8xf32>,
    %94 = arith.truncf %86 : vector<8x8xf32> to vector<8x8xbf16>
    %c0_62 = arith.constant 0 : index
    %c1_63 = arith.constant 1 : index
    %c0_64 = arith.constant 0 : index
    %c0_65 = arith.constant 0 : index
    %95 = vector.load %arg11[%c0_62, %c1_63, %c0_64, %c0_65] : memref<1x2x8x8xbf16, #tpu.memory_space<vmem>>, vector<1x1x8x8xbf16>
    %96 = vector.shape_cast %95 : vector<1x1x8x8xbf16> to vector<8x8xbf16>
    %97 = vector.shape_cast %94 : vector<8x8xbf16> to vector<1x1x8x8xbf16>
    tpu.vector_store %arg11[%c0_62, %c1_63, %c0_64, %c0_65], %97 {strides = array<i32>} : memref<1x2x8x8xbf16, #tpu.memory_space<vmem>>, vector<1x1x8x8xbf16>,
    %98 = arith.truncf %87 : vector<8x8xf32> to vector<8x8xbf16>
    %c0_66 = arith.constant 0 : index
    %c1_67 = arith.constant 1 : index
    %c0_68 = arith.constant 0 : index
    %c0_69 = arith.constant 0 : index
    %99 = vector.load %arg12[%c0_66, %c1_67, %c0_68, %c0_69] : memref<1x2x8x8xbf16, #tpu.memory_space<vmem>>, vector<1x1x8x8xbf16>
    %100 = vector.shape_cast %99 : vector<1x1x8x8xbf16> to vector<8x8xbf16>
    %101 = vector.shape_cast %98 : vector<8x8xbf16> to vector<1x1x8x8xbf16>
    tpu.vector_store %arg12[%c0_66, %c1_67, %c0_68, %c0_69], %101 {strides = array<i32>} : memref<1x2x8x8xbf16, #tpu.memory_space<vmem>>, vector<1x1x8x8xbf16>,
    return
  }
  func.func @transform_0(%arg0: i32, %arg1: i32) -> (i32, i32, i32) {
    %c0_i32 = arith.constant 0 : i32
    %c0_i32_0 = arith.constant 0 : i32
    return %arg0, %arg1, %c0_i32 : i32, i32, i32
  }
  func.func @transform_1(%arg0: i32, %arg1: i32) -> (i32, i32) {
    %c0_i32 = arith.constant 0 : i32
    %c0_i32_0 = arith.constant 0 : i32
    %c0_i32_1 = arith.constant 0 : i32
    return %c0_i32, %c0_i32_0 : i32, i32
  }
  func.func @transform_2(%arg0: i32, %arg1: i32) -> (i32, i32) {
    %c0_i32 = arith.constant 0 : i32
    %c0_i32_0 = arith.constant 0 : i32
    %c0_i32_1 = arith.constant 0 : i32
    return %c0_i32, %c0_i32_0 : i32, i32
  }
  func.func @transform_3(%arg0: i32, %arg1: i32) -> (i32, i32) {
    %c0_i32 = arith.constant 0 : i32
    %c0_i32_0 = arith.constant 0 : i32
    %c0_i32_1 = arith.constant 0 : i32
    return %c0_i32, %c0_i32_0 : i32, i32
  }
  func.func @transform_4(%arg0: i32, %arg1: i32) -> (i32, i32, i32) {
    %c0_i32 = arith.constant 0 : i32
    %c0_i32_0 = arith.constant 0 : i32
    return %arg0, %arg1, %c0_i32 : i32, i32, i32
  }
  func.func @transform_5(%arg0: i32, %arg1: i32) -> (i32, i32, i32) {
    %c0_i32 = arith.constant 0 : i32
    %c0_i32_0 = arith.constant 0 : i32
    return %arg0, %arg1, %c0_i32 : i32, i32, i32
  }
  func.func @transform_6(%arg0: i32, %arg1: i32) -> (i32, i32, i32, i32) {
    %c0_i32 = arith.constant 0 : i32
    %c0_i32_0 = arith.constant 0 : i32
    %c0_i32_1 = arith.constant 0 : i32
    return %arg0, %c0_i32, %arg1, %c0_i32_0 : i32, i32, i32, i32
  }
  func.func @transform_7(%arg0: i32, %arg1: i32) -> (i32, i32, i32, i32) {
    %c0_i32 = arith.constant 0 : i32
    %c0_i32_0 = arith.constant 0 : i32
    %c0_i32_1 = arith.constant 0 : i32
    return %arg0, %c0_i32, %arg1, %c0_i32_0 : i32, i32, i32, i32
  }
  func.func @transform_8(%arg0: i32, %arg1: i32) -> (i32, i32, i32, i32) {
    %c0_i32 = arith.constant 0 : i32
    %c0_i32_0 = arith.constant 0 : i32
    %c0_i32_1 = arith.constant 0 : i32
    return %arg0, %c0_i32, %arg1, %c0_i32_0 : i32, i32, i32, i32
  }
  func.func @transform_9(%arg0: i32, %arg1: i32) -> (i32, i32, i32, i32) {
    %c0_i32 = arith.constant 0 : i32
    %c0_i32_0 = arith.constant 0 : i32
    %c0_i32_1 = arith.constant 0 : i32
    return %arg0, %c0_i32, %arg1, %c0_i32_0 : i32, i32, i32, i32
  }
  func.func @transform_10(%arg0: i32, %arg1: i32) -> (i32, i32, i32, i32) {
    %c0_i32 = arith.constant 0 : i32
    %c0_i32_0 = arith.constant 0 : i32
    %c0_i32_1 = arith.constant 0 : i32
    return %arg0, %c0_i32, %arg1, %c0_i32_0 : i32, i32, i32, i32
  }
}

</mosaic_0001>

<llo_original>
// kernel: tpu_custom_call.1
$region0: #{tpu_custom_call.1}
  #allocation0 [shape = 'u32[]', space=smem, size = 0x4, offset = 0x4, fixed_abs, tag = 'smem constant byte address 0x4 - core index']
  #allocation1 [shape = 'u32[144,128]{1,0:T(1,128)}', space=vmem, size = 0x12000, scoped, tag = 'internal scratch']
  %s0 = inlined_call_operand.hbm [shape: bf16[2,8,32], index: 0, kind: input, shape index: {}]
  %s1 = inlined_call_operand.vmem [shape: bf16[32,32], index: 1, kind: input, shape index: {}]
  %s2 = inlined_call_operand.vmem [shape: bf16[32,16], index: 2, kind: input, shape index: {}]
  %s3 = inlined_call_operand.vmem [shape: bf16[32,16], index: 3, kind: input, shape index: {}]
  %s4 = inlined_call_operand.vmem [shape: f32[2,8,8], index: 4, kind: input, shape index: {}]
  %s5 = inlined_call_operand.vmem [shape: f32[2,8,8], index: 5, kind: input, shape index: {}]
  %s6 = inlined_call_operand.hbm [shape: bf16[2,4,8,8], index: 6, kind: output, shape index: {0}]
  %s7 = inlined_call_operand.hbm [shape: f32[2,2,8,8], index: 7, kind: output, shape index: {1}]
  %s8 = inlined_call_operand.hbm [shape: f32[2,2,8,8], index: 8, kind: output, shape index: {2}]
  %s9 = inlined_call_operand.hbm [shape: bf16[2,2,8,8], index: 9, kind: output, shape index: {3}]
  %s10 = inlined_call_operand.hbm [shape: bf16[2,2,8,8], index: 10, kind: output, shape index: {4}]
  %11 = xla_tuple %s6, %s7, %s8, %s9, %s10
  %s12 = sld [smem:[#allocation0]]
  $region93: #{tpu_custom_call.1} parent=0
    _
  %s14 = ssub.s32 1, %s12
  %s15 = scalar_select 0, %s14, %s12
  $region1: #{tpu_custom_call.1} parent=0
    #allocation2 [shape = 'u8[4096]{0}', space=vmem, size = 0x1000, scoped, tag = 'input window, operand 0']
    #allocation3 [shape = 's32[2]{0}', space=sflag, size = 0x8, scoped, tag = 'scoped memory for tpu_custom_call.1']
    #allocation4 [shape = 's32[2]{0}', space=sflag, size = 0x8, scoped, tag = 'scoped memory for tpu_custom_call.1']
    #allocation5 [shape = 'u8[16384]{0}', space=vmem, size = 0x4000, scoped, tag = 'output window, operand 0']
    #allocation6 [shape = 'u8[16384]{0}', space=vmem, size = 0x4000, scoped, tag = 'output window, operand 1']
    #allocation7 [shape = 's32[2]{0}', space=sflag, size = 0x8, scoped, tag = 'scoped memory for tpu_custom_call.1']
    #allocation8 [shape = 'u8[16384]{0}', space=vmem, size = 0x4000, scoped, tag = 'output window, operand 2']
    #allocation9 [shape = 'u8[8192]{0}', space=vmem, size = 0x2000, scoped, tag = 'output window, operand 3']
    #allocation10 [shape = 's32[2]{0}', space=sflag, size = 0x8, scoped, tag = 'scoped memory for tpu_custom_call.1']
    #allocation11 [shape = 'u8[8192]{0}', space=vmem, size = 0x2000, scoped, tag = 'output window, operand 4']
    %16 = vsyncpa [#allocation3], 0
    %s17 = scalar_lea.sflag [#allocation3], 1
    %18 = vsyncpa %s17, 0
    %19 = vsyncpa [#allocation4], 0
    %s20 = scalar_lea.sflag [#allocation4], 1
    %21 = vsyncpa %s20, 0
    %22 = vsyncpa [#allocation7], 0
    %s23 = scalar_lea.sflag [#allocation7], 1
    %24 = vsyncpa %s23, 0
    %25 = vsyncpa [#allocation10], 0
    %s26 = scalar_lea.sflag [#allocation10], 1
    %27 = vsyncpa %s26, 0
    loop: start=0, step=1, limit=4
    $region2: #{tpu_custom_call.1} parent=1 // loop_pre_header
      _
    $region3: #{tpu_custom_call.1} parent=1 // loop_header
      %s29 = sphi 0, %s33
      %p30 = scmp.ge.s32.totalorder %s29, 4
      %s36 = sphi 0, %s48
      %s37 = sphi 0, %s44
      %s38 = sphi 0, %s36
      %s39 = sphi 0, %s37
      %s40 = sphi 0, %s38
      %s41 = sphi 0, %s39
      %s53 = sphi 0, %s55
      %s56 = sphi 0, %s53
      %s57 = sphi 0, %s56
      %s73 = sphi 0, %s57
      %s77 = sphi 0, %s77
      %s79 = sphi 0, %s77
      %s80 = sphi 0, %s79
      %s94 = sphi 0, %s80
      %s98 = sphi 0, %s98
      %s100 = sphi 0, %s98
      %s101 = sphi 0, %s100
      %s115 = sphi 0, %s101
      %s119 = sphi 0, %s119
      %s121 = sphi 0, %s119
      %s122 = sphi 0, %s121
      %s136 = sphi 0, %s122
      %s144 = sphi 0, %s146
      %s147 = sphi 0, %s144
      %s148 = sphi 0, %s147
      %s164 = sphi 0, %s148
      %s172 = sphi 0, %s174
      %s175 = sphi 0, %s172
      %s176 = sphi 0, %s175
      %s192 = sphi 0, %s176
      %s200 = sphi 0, %s202
      %s203 = sphi 0, %s200
      %s204 = sphi 0, %s203
      %s220 = sphi 0, %s204
      %s228 = sphi 0, %s230
      %s231 = sphi 0, %s228
      %s232 = sphi 0, %s231
      %s248 = sphi 0, %s232
      %s256 = sphi 0, %s258
      %s259 = sphi 0, %s256
      %s260 = sphi 0, %s259
      %s276 = sphi 0, %s260
      %s284 = sphi 0, %s286
      %s287 = sphi 0, %s284
      %s288 = sphi 0, %s287
      %s304 = sphi 0, %s288
      %s312 = sphi 0, %s314
      %s315 = sphi 0, %s312
      %s316 = sphi 0, %s315
      %s332 = sphi 0, %s316
    $region4: #{tpu_custom_call.1} parent=1 // loop_header_branch
      %32 = sbr.rel (%p30) target = $region8
    $region5: #{tpu_custom_call.1} parent=1 // loop_body
      %s34 = ssub.s32 %s29, 1
      %s35 = ssub.s32 %s29, 2
      %s42 = sadd.s32 1, %s37
      %p43 = scmp.ge.s32.totalorder %s42, 1
      %s44 = scalar_select %p43, 0, %s42
      %s45 = sadd.s32 1, %s36
      %s46 = scalar_select %p43, %s45, %s36
      %p47 = scmp.ge.s32.totalorder %s46, 2
      %s48 = scalar_select %p47, 0, %s46
      %s49 = ssub.s32 %s36, %s48
      %s50 = ssub.s32 %s37, %s44
      %s51 = sor.u32 %s49, %s50
      %p52 = scmp.eq.s32.totalorder %s51, 0
      %s54 = sadd.s32 %s53, 1
      %s55 = scalar_select %p52, %s53, %s54
      %p58 = pneg %p52
      %p59 = scmp.eq.s32.totalorder %s29, 1
      %p60 = por %p58, %p59
      %p61 = scmp.ne.s32.totalorder %s53, %s56
      %p62 = scmp.eq.s32.totalorder %s29, 0
      %p63 = por %p61, %p62
      %p64 = scmp.ne.s32.totalorder %s53, %s56
      %p65 = scmp.eq.s32.totalorder %s34, 1
      %p66 = por %p64, %p65
      %p67 = scmp.ne.s32.totalorder %s56, %s57
      %p68 = scmp.eq.s32.totalorder %s34, 0
      %p69 = por %p67, %p68
      %p70 = scmp.ne.s32.totalorder %s56, %s57
      %p71 = scmp.eq.s32.totalorder %s35, 1
      %p72 = por %p70, %p71
      %p74 = scmp.ne.s32.totalorder %s57, %s73
      %p75 = scmp.eq.s32.totalorder %s35, 0
      %p76 = por %p74, %p75
      %s78 = sadd.s32 %s77, 1
      %p81 = scmp.eq.s32.totalorder %s29, 1
      %p82 = scmp.ne.s32.totalorder %s77, %s79
      %p83 = scmp.eq.s32.totalorder %s29, 0
      %p84 = por %p82, %p83
      %p85 = scmp.ne.s32.totalorder %s77, %s79
      %p86 = scmp.eq.s32.totalorder %s34, 1
      %p87 = por %p85, %p86
      %p88 = scmp.ne.s32.totalorder %s79, %s80
      %p89 = scmp.eq.s32.totalorder %s34, 0
      %p90 = por %p88, %p89
      %p91 = scmp.ne.s32.totalorder %s79, %s80
      %p92 = scmp.eq.s32.totalorder %s35, 1
      %p93 = por %p91, %p92
      %p95 = scmp.ne.s32.totalorder %s80, %s94
      %p96 = scmp.eq.s32.totalorder %s35, 0
      %p97 = por %p95, %p96
      %s99 = sadd.s32 %s98, 1
      %p102 = scmp.eq.s32.totalorder %s29, 1
      %p103 = scmp.ne.s32.totalorder %s98, %s100
      %p104 = scmp.eq.s32.totalorder %s29, 0
      %p105 = por %p103, %p104
      %p106 = scmp.ne.s32.totalorder %s98, %s100
      %p107 = scmp.eq.s32.totalorder %s34, 1
      %p108 = por %p106, %p107
      %p109 = scmp.ne.s32.totalorder %s100, %s101
      %p110 = scmp.eq.s32.totalorder %s34, 0
      %p111 = por %p109, %p110
      %p112 = scmp.ne.s32.totalorder %s100, %s101
      %p113 = scmp.eq.s32.totalorder %s35, 1
      %p114 = por %p112, %p113
      %p116 = scmp.ne.s32.totalorder %s101, %s115
      %p117 = scmp.eq.s32.totalorder %s35, 0
      %p118 = por %p116, %p117
      %s120 = sadd.s32 %s119, 1
      %p123 = scmp.eq.s32.totalorder %s29, 1
      %p124 = scmp.ne.s32.totalorder %s119, %s121
      %p125 = scmp.eq.s32.totalorder %s29, 0
      %p126 = por %p124, %p125
      %p127 = scmp.ne.s32.totalorder %s119, %s121
      %p128 = scmp.eq.s32.totalorder %s34, 1
      %p129 = por %p127, %p128
      %p130 = scmp.ne.s32.totalorder %s121, %s122
      %p131 = scmp.eq.s32.totalorder %s34, 0
      %p132 = por %p130, %p131
      %p133 = scmp.ne.s32.totalorder %s121, %s122
      %p134 = scmp.eq.s32.totalorder %s35, 1
      %p135 = por %p133, %p134
      %p137 = scmp.ne.s32.totalorder %s122, %s136
      %p138 = scmp.eq.s32.totalorder %s35, 0
      %p139 = por %p137, %p138
      %s140 = ssub.s32 %s36, %s48
      %s141 = ssub.s32 %s37, %s44
      %s142 = sor.u32 %s140, %s141
      %p143 = scmp.eq.s32.totalorder %s142, 0
      %s145 = sadd.s32 %s144, 1
      %s146 = scalar_select %p143, %s144, %s145
      %p149 = pneg %p143
      %p150 = scmp.eq.s32.totalorder %s29, 1
      %p151 = por %p149, %p150
      %p152 = scmp.ne.s32.totalorder %s144, %s147
      %p153 = scmp.eq.s32.totalorder %s29, 0
      %p154 = por %p152, %p153
      %p155 = scmp.ne.s32.totalorder %s144, %s147
      %p156 = scmp.eq.s32.totalorder %s34, 1
      %p157 = por %p155, %p156
      %p158 = scmp.ne.s32.totalorder %s147, %s148
      %p159 = scmp.eq.s32.totalorder %s34, 0
      %p160 = por %p158, %p159
      %p161 = scmp.ne.s32.totalorder %s147, %s148
      %p162 = scmp.eq.s32.totalorder %s35, 1
      %p163 = por %p161, %p162
      %p165 = scmp.ne.s32.totalorder %s148, %s164
      %p166 = scmp.eq.s32.totalorder %s35, 0
      %p167 = por %p165, %p166
      %s168 = ssub.s32 %s36, %s48
      %s169 = ssub.s32 %s37, %s44
      %s170 = sor.u32 %s168, %s169
      %p171 = scmp.eq.s32.totalorder %s170, 0
      %s173 = sadd.s32 %s172, 1
      %s174 = scalar_select %p171, %s172, %s173
      %p177 = pneg %p171
      %p178 = scmp.eq.s32.totalorder %s29, 1
      %p179 = por %p177, %p178
      %p180 = scmp.ne.s32.totalorder %s172, %s175
      %p181 = scmp.eq.s32.totalorder %s29, 0
      %p182 = por %p180, %p181
      %p183 = scmp.ne.s32.totalorder %s172, %s175
      %p184 = scmp.eq.s32.totalorder %s34, 1
      %p185 = por %p183, %p184
      %p186 = scmp.ne.s32.totalorder %s175, %s176
      %p187 = scmp.eq.s32.totalorder %s34, 0
      %p188 = por %p186, %p187
      %p189 = scmp.ne.s32.totalorder %s175, %s176
      %p190 = scmp.eq.s32.totalorder %s35, 1
      %p191 = por %p189, %p190
      %p193 = scmp.ne.s32.totalorder %s176, %s192
      %p194 = scmp.eq.s32.totalorder %s35, 0
      %p195 = por %p193, %p194
      %s196 = ssub.s32 %s36, %s48
      %s197 = ssub.s32 %s37, %s44
      %s198 = sor.u32 %s196, %s197
      %p199 = scmp.eq.s32.totalorder %s198, 0
      %s201 = sadd.s32 %s200, 1
      %s202 = scalar_select %p199, %s200, %s201
      %p205 = pneg %p199
      %p206 = scmp.eq.s32.totalorder %s29, 1
      %p207 = por %p205, %p206
      %p208 = scmp.ne.s32.totalorder %s200, %s203
      %p209 = scmp.eq.s32.totalorder %s29, 0
      %p210 = por %p208, %p209
      %p211 = scmp.ne.s32.totalorder %s200, %s203
      %p212 = scmp.eq.s32.totalorder %s34, 1
      %p213 = por %p211, %p212
      %p214 = scmp.ne.s32.totalorder %s203, %s204
      %p215 = scmp.eq.s32.totalorder %s34, 0
      %p216 = por %p214, %p215
      %p217 = scmp.ne.s32.totalorder %s203, %s204
      %p218 = scmp.eq.s32.totalorder %s35, 1
      %p219 = por %p217, %p218
      %p221 = scmp.ne.s32.totalorder %s204, %s220
      %p222 = scmp.eq.s32.totalorder %s35, 0
      %p223 = por %p221, %p222
      %s224 = ssub.s32 %s36, %s48
      %s225 = ssub.s32 %s37, %s44
      %s226 = sor.u32 %s224, %s225
      %p227 = scmp.eq.s32.totalorder %s226, 0
      %s229 = sadd.s32 %s228, 1
      %s230 = scalar_select %p227, %s228, %s229
      %p233 = pneg %p227
      %p234 = scmp.eq.s32.totalorder %s29, 1
      %p235 = por %p233, %p234
      %p236 = scmp.ne.s32.totalorder %s228, %s231
      %p237 = scmp.eq.s32.totalorder %s29, 0
      %p238 = por %p236, %p237
      %p239 = scmp.ne.s32.totalorder %s228, %s231
      %p240 = scmp.eq.s32.totalorder %s34, 1
      %p241 = por %p239, %p240
      %p242 = scmp.ne.s32.totalorder %s231, %s232
      %p243 = scmp.eq.s32.totalorder %s34, 0
      %p244 = por %p242, %p243
      %p245 = scmp.ne.s32.totalorder %s231, %s232
      %p246 = scmp.eq.s32.totalorder %s35, 1
      %p247 = por %p245, %p246
      %p249 = scmp.ne.s32.totalorder %s232, %s248
      %p250 = scmp.eq.s32.totalorder %s35, 0
      %p251 = por %p249, %p250
      %s252 = ssub.s32 %s36, %s48
      %s253 = ssub.s32 %s37, %s44
      %s254 = sor.u32 %s252, %s253
      %p255 = scmp.eq.s32.totalorder %s254, 0
      %s257 = sadd.s32 %s256, 1
      %s258 = scalar_select %p255, %s256, %s257
      %p261 = pneg %p255
      %p262 = scmp.eq.s32.totalorder %s29, 1
      %p263 = por %p261, %p262
      %p264 = scmp.ne.s32.totalorder %s256, %s259
      %p265 = scmp.eq.s32.totalorder %s29, 0
      %p266 = por %p264, %p265
      %p267 = scmp.ne.s32.totalorder %s256, %s259
      %p268 = scmp.eq.s32.totalorder %s34, 1
      %p269 = por %p267, %p268
      %p270 = scmp.ne.s32.totalorder %s259, %s260
      %p271 = scmp.eq.s32.totalorder %s34, 0
      %p272 = por %p270, %p271
      %p273 = scmp.ne.s32.totalorder %s259, %s260
      %p274 = scmp.eq.s32.totalorder %s35, 1
      %p275 = por %p273, %p274
      %p277 = scmp.ne.s32.totalorder %s260, %s276
      %p278 = scmp.eq.s32.totalorder %s35, 0
      %p279 = por %p277, %p278
      %s280 = ssub.s32 %s36, %s48
      %s281 = ssub.s32 %s37, %s44
      %s282 = sor.u32 %s280, %s281
      %p283 = scmp.eq.s32.totalorder %s282, 0
      %s285 = sadd.s32 %s284, 1
      %s286 = scalar_select %p283, %s284, %s285
      %p289 = pneg %p283
      %p290 = scmp.eq.s32.totalorder %s29, 1
      %p291 = por %p289, %p290
      %p292 = scmp.ne.s32.totalorder %s284, %s287
      %p293 = scmp.eq.s32.totalorder %s29, 0
      %p294 = por %p292, %p293
      %p295 = scmp.ne.s32.totalorder %s284, %s287
      %p296 = scmp.eq.s32.totalorder %s34, 1
      %p297 = por %p295, %p296
      %p298 = scmp.ne.s32.totalorder %s287, %s288
      %p299 = scmp.eq.s32.totalorder %s34, 0
      %p300 = por %p298, %p299
      %p301 = scmp.ne.s32.totalorder %s287, %s288
      %p302 = scmp.eq.s32.totalorder %s35, 1
      %p303 = por %p301, %p302
      %p305 = scmp.ne.s32.totalorder %s288, %s304
      %p306 = scmp.eq.s32.totalorder %s35, 0
      %p307 = por %p305, %p306
      %s308 = ssub.s32 %s36, %s48
      %s309 = ssub.s32 %s37, %s44
      %s310 = sor.u32 %s308, %s309
      %p311 = scmp.eq.s32.totalorder %s310, 0
      %s313 = sadd.s32 %s312, 1
      %s314 = scalar_select %p311, %s312, %s313
      %p317 = pneg %p311
      %p318 = scmp.eq.s32.totalorder %s29, 1
      %p319 = por %p317, %p318
      %p320 = scmp.ne.s32.totalorder %s312, %s315
      %p321 = scmp.eq.s32.totalorder %s29, 0
      %p322 = por %p320, %p321
      %p323 = scmp.ne.s32.totalorder %s312, %s315
      %p324 = scmp.eq.s32.totalorder %s34, 1
      %p325 = por %p323, %p324
      %p326 = scmp.ne.s32.totalorder %s315, %s316
      %p327 = scmp.eq.s32.totalorder %s34, 0
      %p328 = por %p326, %p327
      %p329 = scmp.ne.s32.totalorder %s315, %s316
      %p330 = scmp.eq.s32.totalorder %s35, 1
      %p331 = por %p329, %p330
      %p333 = scmp.ne.s32.totalorder %s316, %s332
      %p334 = scmp.eq.s32.totalorder %s35, 0
      %p335 = por %p333, %p334
      %p336 = scmp.le.s32.totalorder 1, %s29
      %p337 = scmp.lt.s32.totalorder %s29, 3
      %p338 = pnand %p336, %p337
      %p339 = pneg %p338
      // Predicated region
      $region9: #{tpu_custom_call.1} parent=5 // pred_check
        _
      $region10: #{tpu_custom_call.1} parent=5 // pred_check_branch
        %341 = sbr.rel (%p338) target = $region12
      $region11: #{tpu_custom_call.1} parent=5 // pred_region
        %s342 = ssub.s32 %s29, 1
        // Predicated region
        $region13: #{tpu_custom_call.1} parent=11 // pred_check
          %p343 = pneg %p90
        $region14: #{tpu_custom_call.1} parent=11 // pred_check_branch
          %345 = sbr.rel (%p343) target = $region16
        $region15: #{tpu_custom_call.1} parent=11 // pred_region
          _
        $region16: #{tpu_custom_call.1} parent=11 // pred_fallthru
          _
        // Predicated region
        $region17: #{tpu_custom_call.1} parent=11 // pred_check
          %p346 = pneg %p111
        $region18: #{tpu_custom_call.1} parent=11 // pred_check_branch
          %348 = sbr.rel (%p346) target = $region20
        $region19: #{tpu_custom_call.1} parent=11 // pred_region
          _
        $region20: #{tpu_custom_call.1} parent=11 // pred_fallthru
          _
        // Predicated region
        $region21: #{tpu_custom_call.1} parent=11 // pred_check
          %p349 = pneg %p132
        $region22: #{tpu_custom_call.1} parent=11 // pred_check_branch
          %351 = sbr.rel (%p349) target = $region24
        $region23: #{tpu_custom_call.1} parent=11 // pred_region
          _
        $region24: #{tpu_custom_call.1} parent=11 // pred_fallthru
          _
      $region12: #{tpu_custom_call.1} parent=5 // pred_fallthru
        _
      %p352 = scmp.lt.s32.totalorder %s29, 2
      // Predicated region
      $region25: #{tpu_custom_call.1} parent=5 // pred_check
        %p353 = pneg %p352
      $region26: #{tpu_custom_call.1} parent=5 // pred_check_branch
        %355 = sbr.rel (%p353) target = $region28
      $region27: #{tpu_custom_call.1} parent=5 // pred_region
        // Predicated region
        $region29: #{tpu_custom_call.1} parent=27 // pred_check
          %p356 = pneg %p63
        $region30: #{tpu_custom_call.1} parent=27 // pred_check_branch
          %358 = sbr.rel (%p356) target = $region32
        $region31: #{tpu_custom_call.1} parent=27 // pred_region
          %s359 = sand.u32 %s53, 1
          %s360 = scalar_lea.sflag [#allocation3], %s359
          %s361 = sand.u32 %s53, 1
          %s362 = smul.addr %s361, 4
          %s363 = scalar_lea.vmem [#allocation2], %s362
          %s365 = ssub.s32 64, 64
          %366 = vsyncadd %s360, %s365
          %s367 = sadd.s32 %s37, %s36
          %s368 = smul.addr %s367, 64
          %s369 = scalar_lea.hbm %s0, %s368
          %s371 = sshll.u32 %s363, 4
          %s372 = int_to_ptr.vmem [resolvable:$true] %s371
          %374 = dma.hbm_to_vmem [thread:$0]  %s369, 64, %s372, %s360
        $region32: #{tpu_custom_call.1} parent=27 // pred_fallthru
          _
        // Predicated region
        $region33: #{tpu_custom_call.1} parent=27 // pred_check
          %p375 = pneg %p154
        $region34: #{tpu_custom_call.1} parent=27 // pred_check_branch
          %377 = sbr.rel (%p375) target = $region36
        $region35: #{tpu_custom_call.1} parent=27 // pred_region
          %p378 = scmp.lt.s32.totalorder %s36, 1
          %s379 = scalar_select %p378, %s36, 1
          %p380 = scmp.lt.s32.totalorder %s37, 0
          %s381 = scalar_select %p380, %s37, 0
          %s382 = sadd.s32 %s381, %s379
          %s383 = smul.addr %s382, 8
          %s384 = scalar_lea.vmem %s4, %s383
        $region36: #{tpu_custom_call.1} parent=27 // pred_fallthru
          _
        // Predicated region
        $region37: #{tpu_custom_call.1} parent=27 // pred_check
          %p385 = pneg %p182
        $region38: #{tpu_custom_call.1} parent=27 // pred_check_branch
          %387 = sbr.rel (%p385) target = $region40
        $region39: #{tpu_custom_call.1} parent=27 // pred_region
          %p388 = scmp.lt.s32.totalorder %s36, 1
          %s389 = scalar_select %p388, %s36, 1
          %p390 = scmp.lt.s32.totalorder %s37, 0
          %s391 = scalar_select %p390, %s37, 0
          %s392 = sadd.s32 %s391, %s389
          %s393 = smul.addr %s392, 8
          %s394 = scalar_lea.vmem %s5, %s393
        $region40: #{tpu_custom_call.1} parent=27 // pred_fallthru
          _
      $region28: #{tpu_custom_call.1} parent=5 // pred_fallthru
        _
      %p395 = scmp.le.s32.totalorder 1, %s29
      %p396 = scmp.lt.s32.totalorder %s29, 3
      %p397 = pnand %p395, %p396
      %p398 = pneg %p397
      // Predicated region
      $region41: #{tpu_custom_call.1} parent=5 // pred_check
        _
      $region42: #{tpu_custom_call.1} parent=5 // pred_check_branch
        %400 = sbr.rel (%p397) target = $region44
      $region43: #{tpu_custom_call.1} parent=5 // pred_region
        %s401 = ssub.s32 %s29, 1
        %s402 = sand.u32 %s56, 1
        %s403 = scalar_lea.sflag [#allocation3], %s402
        %s404 = sand.u32 %s56, 1
        %s405 = smul.addr %s404, 4
        %s406 = scalar_lea.vmem [#allocation2], %s405
        // Predicated region
        $region45: #{tpu_custom_call.1} parent=43 // pred_check
          %p407 = pneg %p69
        $region46: #{tpu_custom_call.1} parent=43 // pred_check_branch
          %409 = sbr.rel (%p407) target = $region48
        $region47: #{tpu_custom_call.1} parent=43 // pred_region
          %410 = dma.done %s403, 64
        $region48: #{tpu_custom_call.1} parent=43 // pred_fallthru
          _
        %s411 = sand.u32 %s56, 1
        %s412 = scalar_lea.sflag [#allocation3], %s411
        %s413 = sand.u32 %s56, 1
        %s414 = smul.addr %s413, 4
        %s415 = scalar_lea.vmem [#allocation2], %s414
        %p416 = pneg %p69
        %p417 = pneg %p66
        %p418 = pneg %p90
        %p419 = pneg %p87
        %p420 = pneg %p111
        %p421 = pneg %p108
        %p422 = pneg %p132
        %p423 = pneg %p129
        %p424 = scmp.lt.s32.totalorder %s38, 1
        %s425 = scalar_select %p424, %s38, 1
        %p426 = scmp.lt.s32.totalorder %s39, 0
        %s427 = scalar_select %p426, %s39, 0
        %s428 = sadd.s32 %s427, %s425
        %s429 = smul.addr %s428, 8
        %s430 = scalar_lea.vmem %s4, %s429
        %p431 = pneg %p160
        %p432 = pneg %p157
        %p433 = scmp.lt.s32.totalorder %s38, 1
        %s434 = scalar_select %p433, %s38, 1
        %p435 = scmp.lt.s32.totalorder %s39, 0
        %s436 = scalar_select %p435, %s39, 0
        %s437 = sadd.s32 %s436, %s434
        %s438 = smul.addr %s437, 8
        %s439 = scalar_lea.vmem %s5, %s438
        %p440 = pneg %p188
        %p441 = pneg %p185
        %p442 = pneg %p216
        %p443 = pneg %p213
        %s444 = sand.u32 %s203, 1
        %s445 = scalar_lea.sflag [#allocation4], %s444
        %s446 = sand.u32 %s203, 1
        %s447 = smul.addr %s446, 16
        %s448 = scalar_lea.vmem [#allocation5], %s447
        %p449 = pneg %p244
        %p450 = pneg %p241
        %s451 = sand.u32 %s34, 1
        %s452 = scalar_lea.sflag [#allocation7], %s451
        %s453 = sand.u32 %s231, 1
        %s454 = smul.addr %s453, 16
        %s455 = scalar_lea.vmem [#allocation6], %s454
        %p456 = pneg %p272
        %p457 = pneg %p269
        %s458 = sand.u32 %s34, 1
        %s459 = scalar_lea.sflag [#allocation7], %s458
        %s460 = sand.u32 %s259, 1
        %s461 = smul.addr %s460, 16
        %s462 = scalar_lea.vmem [#allocation8], %s461
        %p463 = pneg %p300
        %p464 = pneg %p297
        %s465 = sand.u32 %s34, 1
        %s466 = scalar_lea.sflag [#allocation10], %s465
        %s467 = sand.u32 %s287, 1
        %s468 = smul.addr %s467, 8
        %s469 = scalar_lea.vmem [#allocation9], %s468
        %p470 = pneg %p328
        %p471 = pneg %p325
        %s472 = sand.u32 %s34, 1
        %s473 = scalar_lea.sflag [#allocation10], %s472
        %s474 = sand.u32 %s315, 1
        %s475 = smul.addr %s474, 8
        %s476 = scalar_lea.vmem [#allocation11], %s475
        %p477 = scmp.lt.s32.totalorder %s38, 1
        %s478 = scalar_select %p477, %s38, 1
        %p479 = scmp.lt.s32.totalorder %s39, 0
        %s480 = scalar_select %p479, %s39, 0
        %s481 = sadd.s32 %s480, %s478
        %s482 = smul.addr %s481, 8
        %s483 = scalar_lea.vmem %s4, %s482
        %p484 = scmp.lt.s32.totalorder %s38, 1
        %s485 = scalar_select %p484, %s38, 1
        %p486 = scmp.lt.s32.totalorder %s39, 0
        %s487 = scalar_select %p486, %s39, 0
        %s488 = sadd.s32 %s487, %s485
        %s489 = smul.addr %s488, 8
        %s490 = scalar_lea.vmem %s5, %s489
        %v492 = vld [vmem:[%s406] sm:$0xf]
        %v493 = vld [vmem:[%s1] sm:$0xf]
        %v494 = vld [vmem:[%s1 + $0x4] sm:$0xf]
        %v495 = vld [vmem:[%s1 + $0x8] sm:$0xf]
        %v496 = vld [vmem:[%s1 + $0xc] sm:$0xf]
        %v501 = vunpack.c.l.b16 %v493
        %v502 = vunpack.c.l.b16 %v494
        %v503 = vunpack.c.l.b16 %v495
        %v504 = vunpack.c.l.b16 %v496
        %v505 = vpack.c.b16 %v502, %v501
        %v506 = vpack.c.b16 %v504, %v503
        %vm509 = vcmask 261120
        %v511 = vsel %vm509, %v492, 0
        %513 = vmatprep.subr.bf16.mxu0 0
        %514 = vmatpush1.bf16.msra.mxu0 0
        %515 = vmatprep.subr.bf16.mxu0 0
        %516 = vmatpush1.bf16.msra.mxu0 0
        %517 = vmatprep.subr.bf16.mxu0 0
        %518 = vmatpush1.bf16.msra.mxu0 0
        %519 = vmatprep.subr.bf16.mxu0 0
        %520 = vmatpush1.bf16.msra.mxu0 0
        %521 = vmatprep.subr.bf16.mxu0 0
        %522 = vmatpush1.bf16.msra.mxu0 0
        %523 = vmatprep.subr.bf16.mxu0 0
        %524 = vmatpush1.bf16.msra.mxu0 0
        %525 = vmatprep.subr.bf16.mxu0 0
        %526 = vmatpush1.bf16.msra.mxu0 %v506
        %527 = vmatprep.subr.bf16.mxu0 0
        %528 = vmatpush1.bf16.msra.mxu0 %v505
        %529 = vmatprep.subr.bf16.mxu0 0
        %530 = vmatpush2.bf16.msra.mxu0 0
        %531 = vmatprep.subr.bf16.mxu0 0
        %532 = vmatpush2.bf16.msra.mxu0 0
        %533 = vmatprep.subr.bf16.mxu0 0
        %534 = vmatpush2.bf16.msra.mxu0 0
        %535 = vmatprep.subr.bf16.mxu0 0
        %536 = vmatpush2.bf16.msra.mxu0 0
        %537 = vmatprep.subr.bf16.mxu0 0
        %538 = vmatpush2.bf16.msra.mxu0 0
        %539 = vmatprep.subr.bf16.mxu0 0
        %540 = vmatpush2.bf16.msra.mxu0 0
        %541 = vmatprep.subr.bf16.mxu0 0
        %542 = vmatpush2.bf16.msra.mxu0 0
        %543 = vmatprep.subr.bf16.mxu0 0
        %544 = vmatpush2.bf16.msra.mxu0 0
        %545 = vmatprep.mubr.bf16.mxu0 0
        %546 = vmatmul.mubr.bf16.gmra.mxu0 %v511
        %v547 = vpop.f32.mrf.mxu0
        %v548 = vadd.f32 0.0, %v547
        %v549 = vpop.f32.mrf.mxu0
        %v550 = vpop.f32.mrf.mxu0
        %v551 = vpop.f32.mrf.mxu0
        %552 = vdwg.mxu0
        %v553 = vld [vmem:[%s2] sm:$0xf]
        %v554 = vld [vmem:[%s2 + $0x4] sm:$0xf]
        %v555 = vld [vmem:[%s2 + $0x8] sm:$0xf]
        %v556 = vld [vmem:[%s2 + $0xc] sm:$0xf]
        %v561 = vunpack.c.l.b16 %v553
        %v562 = vunpack.c.l.b16 %v554
        %v563 = vunpack.c.l.b16 %v555
        %v564 = vunpack.c.l.b16 %v556
        %v565 = vpack.c.b16 %v562, %v561
        %v566 = vpack.c.b16 %v564, %v563
        %569 = vmatprep.subr.bf16.mxu0 0
        %570 = vmatpush1.bf16.msra.mxu0 0
        %571 = vmatprep.subr.bf16.mxu0 0
        %572 = vmatpush1.bf16.msra.mxu0 0
        %573 = vmatprep.subr.bf16.mxu0 0
        %574 = vmatpush1.bf16.msra.mxu0 0
        %575 = vmatprep.subr.bf16.mxu0 0
        %576 = vmatpush1.bf16.msra.mxu0 0
        %577 = vmatprep.subr.bf16.mxu0 0
        %578 = vmatpush1.bf16.msra.mxu0 0
        %579 = vmatprep.subr.bf16.mxu0 0
        %580 = vmatpush1.bf16.msra.mxu0 0
        %581 = vmatprep.subr.bf16.mxu0 0
        %582 = vmatpush1.bf16.msra.mxu0 %v566
        %583 = vmatprep.subr.bf16.mxu0 0
        %584 = vmatpush1.bf16.msra.mxu0 %v565
        %585 = vmatprep.subr.bf16.mxu0 0
        %586 = vmatpush2.bf16.msra.mxu0 0
        %587 = vmatprep.subr.bf16.mxu0 0
        %588 = vmatpush2.bf16.msra.mxu0 0
        %589 = vmatprep.subr.bf16.mxu0 0
        %590 = vmatpush2.bf16.msra.mxu0 0
        %591 = vmatprep.subr.bf16.mxu0 0
        %592 = vmatpush2.bf16.msra.mxu0 0
        %593 = vmatprep.subr.bf16.mxu0 0
        %594 = vmatpush2.bf16.msra.mxu0 0
        %595 = vmatprep.subr.bf16.mxu0 0
        %596 = vmatpush2.bf16.msra.mxu0 0
        %597 = vmatprep.subr.bf16.mxu0 0
        %598 = vmatpush2.bf16.msra.mxu0 0
        %599 = vmatprep.subr.bf16.mxu0 0
        %600 = vmatpush2.bf16.msra.mxu0 0
        %601 = vmatprep.mubr.bf16.mxu0 0
        %602 = vmatmul.mubr.bf16.gmra.mxu0 %v511
        %v603 = vpop.f32.mrf.mxu0
        %v604 = vadd.f32 0.0, %v603
        %v605 = vpop.f32.mrf.mxu0
        %v606 = vpop.f32.mrf.mxu0
        %v607 = vpop.f32.mrf.mxu0
        %608 = vdwg.mxu0
        %v609 = vld [vmem:[%s3] sm:$0xf]
        %v610 = vld [vmem:[%s3 + $0x4] sm:$0xf]
        %v611 = vld [vmem:[%s3 + $0x8] sm:$0xf]
        %v612 = vld [vmem:[%s3 + $0xc] sm:$0xf]
        %v617 = vunpack.c.l.b16 %v609
        %v618 = vunpack.c.l.b16 %v610
        %v619 = vunpack.c.l.b16 %v611
        %v620 = vunpack.c.l.b16 %v612
        %v621 = vpack.c.b16 %v618, %v617
        %v622 = vpack.c.b16 %v620, %v619
        %625 = vmatprep.subr.bf16.mxu0 0
        %626 = vmatpush1.bf16.msra.mxu0 0
        %627 = vmatprep.subr.bf16.mxu0 0
        %628 = vmatpush1.bf16.msra.mxu0 0
        %629 = vmatprep.subr.bf16.mxu0 0
        %630 = vmatpush1.bf16.msra.mxu0 0
        %631 = vmatprep.subr.bf16.mxu0 0
        %632 = vmatpush1.bf16.msra.mxu0 0
        %633 = vmatprep.subr.bf16.mxu0 0
        %634 = vmatpush1.bf16.msra.mxu0 0
        %635 = vmatprep.subr.bf16.mxu0 0
        %636 = vmatpush1.bf16.msra.mxu0 0
        %637 = vmatprep.subr.bf16.mxu0 0
        %638 = vmatpush1.bf16.msra.mxu0 %v622
        %639 = vmatprep.subr.bf16.mxu0 0
        %640 = vmatpush1.bf16.msra.mxu0 %v621
        %641 = vmatprep.subr.bf16.mxu0 0
        %642 = vmatpush2.bf16.msra.mxu0 0
        %643 = vmatprep.subr.bf16.mxu0 0
        %644 = vmatpush2.bf16.msra.mxu0 0
        %645 = vmatprep.subr.bf16.mxu0 0
        %646 = vmatpush2.bf16.msra.mxu0 0
        %647 = vmatprep.subr.bf16.mxu0 0
        %648 = vmatpush2.bf16.msra.mxu0 0
        %649 = vmatprep.subr.bf16.mxu0 0
        %650 = vmatpush2.bf16.msra.mxu0 0
        %651 = vmatprep.subr.bf16.mxu0 0
        %652 = vmatpush2.bf16.msra.mxu0 0
        %653 = vmatprep.subr.bf16.mxu0 0
        %654 = vmatpush2.bf16.msra.mxu0 0
        %655 = vmatprep.subr.bf16.mxu0 0
        %656 = vmatpush2.bf16.msra.mxu0 0
        %657 = vmatprep.mubr.bf16.mxu0 0
        %658 = vmatmul.mubr.bf16.gmra.mxu0 %v511
        %v659 = vpop.f32.mrf.mxu0
        %v660 = vadd.f32 0.0, %v659
        %v661 = vpop.f32.mrf.mxu0
        %v662 = vpop.f32.mrf.mxu0
        %v663 = vpop.f32.mrf.mxu0
        %664 = vdwg.mxu0
        %v665 = vmul.f32 %v548, 0.35355338
        %v666 = vld [vmem:[%s483] sm:$0xff]
        %v667 = vld [vmem:[%s490] sm:$0xff]
        %v668 = vlaneseq
        %v669 = vand.u32 %v668, 127
        %vm670 = vcmp.lt.s32.totalorder %v669, 4
        %v671 = vsel %vm670, -1.0, 1.0
        %v672 = vmul.f32 %v665, %v666
        %vm673 = vcmask 1047616
        %674 = vrot.lane.b32.xlu0 %v665, 8
        %v675 = vpop.permute.xlu0 %674
        %v676 = vsel %vm673, %v675, %v665
        %677 = vrot.lane.b32.xlu0 %v676, 8
        %v678 = vpop.permute.xlu0 %677
        %v679 = vsel %vm673, %v678, %v665
        %681 = vrot.lane.b32.xlu0 %v671, 4
        %v682 = vpop.permute.xlu0 %681
        %v684 = vmul.f32 %v679, %v682
        %686 = vrot.lane.b32.xlu0 %v667, 4
        %v687 = vpop.permute.xlu0 %686
        %v689 = vmul.f32 %v684, %v687
        %691 = vrot.lane.b32.xlu0 %v689, 124
        %v692 = vpop.permute.xlu0 %691
        %v694 = vadd.f32 %v672, %v692
        %v695 = vpack.c.bf16 %v694, %v694
        %vm696 = vcmask 60416
        %697 = vst.msk [vmem:[%s448] sm:$0xf] %vm696, %v695
        %699 = vrot.lane.b32.xlu0 %v666, 8
        %v700 = vpop.permute.xlu0 %699
        %v702 = vmul.f32 %v665, %v700
        %704 = vrot.lane.b32.xlu0 %v665, 120
        %v705 = vpop.permute.xlu0 %704
        %707 = vrot.lane.b32.xlu0 %v705, 8
        %v708 = vpop.permute.xlu0 %707
        %v709 = vsel %vm673, %v708, %v705
        %710 = vrot.lane.b32.xlu0 %v709, 8
        %v711 = vpop.permute.xlu0 %710
        %v712 = vsel %vm673, %v711, %v705
        %v713 = vmul.f32 %v712, %v682
        %v714 = vmul.f32 %v713, %v687
        %716 = vrot.lane.b32.xlu0 %v714, 4
        %v717 = vpop.permute.xlu0 %716
        %v719 = vadd.f32 %v702, %v717
        %v720 = vpack.c.bf16 %v719, %v719
        %v722 = vunpack.c.l.b16 %v720
        %v723 = vpack.c.b16 %v722, %v722
        %724 = vrot.lane.b32.xlu0 %v723, 120
        %v725 = vpop.permute.xlu0 %724
        %s727 = scalar_lea.vmem %s448, 4 [#allocation5]
        %728 = vst.msk [vmem:[%s727] sm:$0xf] %vm696, %v725
        %729 = vrot.lane.b32.xlu0 %v666, 16
        %v730 = vpop.permute.xlu0 %729
        %v732 = vmul.f32 %v665, %v730
        %733 = vrot.lane.b32.xlu0 %v665, 112
        %v734 = vpop.permute.xlu0 %733
        %736 = vrot.lane.b32.xlu0 %v734, 8
        %v737 = vpop.permute.xlu0 %736
        %v738 = vsel %vm673, %v737, %v734
        %739 = vrot.lane.b32.xlu0 %v738, 8
        %v740 = vpop.permute.xlu0 %739
        %v741 = vsel %vm673, %v740, %v734
        %v742 = vmul.f32 %v741, %v682
        %v743 = vmul.f32 %v742, %v687
        %745 = vrot.lane.b32.xlu0 %v743, 12
        %v746 = vpop.permute.xlu0 %745
        %v748 = vadd.f32 %v732, %v746
        %v749 = vpack.c.bf16 %v748, %v748
        %v751 = vunpack.c.l.b16 %v749
        %v752 = vpack.c.b16 %v751, %v751
        %753 = vrot.lane.b32.xlu0 %v752, 112
        %v754 = vpop.permute.xlu0 %753
        %s756 = scalar_lea.vmem %s448, 8 [#allocation5]
        %757 = vst.msk [vmem:[%s756] sm:$0xf] %vm696, %v754
        %758 = vrot.lane.b32.xlu0 %v666, 24
        %v759 = vpop.permute.xlu0 %758
        %v761 = vmul.f32 %v665, %v759
        %762 = vrot.lane.b32.xlu0 %v665, 104
        %v763 = vpop.permute.xlu0 %762
        %765 = vrot.lane.b32.xlu0 %v763, 8
        %v766 = vpop.permute.xlu0 %765
        %v767 = vsel %vm673, %v766, %v763
        %768 = vrot.lane.b32.xlu0 %v767, 8
        %v769 = vpop.permute.xlu0 %768
        %v770 = vsel %vm673, %v769, %v763
        %v771 = vmul.f32 %v770, %v682
        %v772 = vmul.f32 %v771, %v687
        %774 = vrot.lane.b32.xlu0 %v772, 20
        %v775 = vpop.permute.xlu0 %774
        %v777 = vadd.f32 %v761, %v775
        %v778 = vpack.c.bf16 %v777, %v777
        %v780 = vunpack.c.l.b16 %v778
        %v781 = vpack.c.b16 %v780, %v780
        %782 = vrot.lane.b32.xlu0 %v781, 104
        %v783 = vpop.permute.xlu0 %782
        %s785 = scalar_lea.vmem %s448, 12 [#allocation5]
        %786 = vst.msk [vmem:[%s785] sm:$0xf] %vm696, %v783
        %v787 = vmul.f32 %v604, %v666
        %788 = vrot.lane.b32.xlu0 %v604, 8
        %v789 = vpop.permute.xlu0 %788
        %v790 = vsel %vm673, %v789, %v604
        %791 = vrot.lane.b32.xlu0 %v790, 8
        %v792 = vpop.permute.xlu0 %791
        %v793 = vsel %vm673, %v792, %v604
        %v794 = vmul.f32 %v793, %v682
        %v795 = vmul.f32 %v794, %v687
        %797 = vrot.lane.b32.xlu0 %v795, 124
        %v798 = vpop.permute.xlu0 %797
        %v800 = vadd.f32 %v787, %v798
        %vm801 = vcmask 64512
        %802 = vst.msk [vmem:[%s455] sm:$0xff] %vm801, %v800
        %803 = vst.msk [vmem:[%s462] sm:$0xff] %vm801, %v660
        %v804 = vpack.c.bf16 %v800, %v800
        %805 = vst.msk [vmem:[%s469] sm:$0xf] %vm696, %v804
        %v806 = vpack.c.bf16 %v660, %v660
        %807 = vst.msk [vmem:[%s476] sm:$0xf] %vm696, %v806
        %v808 = vmul.f32 %v604, %v700
        %810 = vrot.lane.b32.xlu0 %v604, 120
        %v811 = vpop.permute.xlu0 %810
        %813 = vrot.lane.b32.xlu0 %v811, 8
        %v814 = vpop.permute.xlu0 %813
        %v815 = vsel %vm673, %v814, %v811
        %816 = vrot.lane.b32.xlu0 %v815, 8
        %v817 = vpop.permute.xlu0 %816
        %v818 = vsel %vm673, %v817, %v811
        %v819 = vmul.f32 %v818, %v682
        %v820 = vmul.f32 %v819, %v687
        %822 = vrot.lane.b32.xlu0 %v820, 4
        %v823 = vpop.permute.xlu0 %822
        %v825 = vadd.f32 %v808, %v823
        %827 = vrot.lane.b32.xlu0 %v825, 120
        %v828 = vpop.permute.xlu0 %827
        %s830 = scalar_lea.vmem %s455, 8 [#allocation6]
        %831 = vst.msk [vmem:[%s830] sm:$0xff] %vm801, %v828
        %833 = vrot.lane.b32.xlu0 %v660, 120
        %v834 = vpop.permute.xlu0 %833
        %s836 = scalar_lea.vmem %s462, 8 [#allocation8]
        %837 = vst.msk [vmem:[%s836] sm:$0xff] %vm801, %v834
        %v838 = vpack.c.bf16 %v825, %v825
        %v840 = vunpack.c.l.b16 %v838
        %v841 = vpack.c.b16 %v840, %v840
        %842 = vrot.lane.b32.xlu0 %v841, 120
        %v843 = vpop.permute.xlu0 %842
        %s845 = scalar_lea.vmem %s469, 4 [#allocation9]
        %846 = vst.msk [vmem:[%s845] sm:$0xf] %vm696, %v843
        %v848 = vunpack.c.l.b16 %v806
        %v849 = vpack.c.b16 %v848, %v848
        %850 = vrot.lane.b32.xlu0 %v849, 120
        %v851 = vpop.permute.xlu0 %850
        %s853 = scalar_lea.vmem %s476, 4 [#allocation11]
        %854 = vst.msk [vmem:[%s853] sm:$0xf] %vm696, %v851
        %s855 = sand.u32 %s203, 1
        %s856 = scalar_lea.sflag [#allocation4], %s855
        %s857 = sand.u32 %s203, 1
        %s858 = smul.addr %s857, 16
        %s859 = scalar_lea.vmem [#allocation5], %s858
        %s860 = sand.u32 %s34, 1
        %s861 = scalar_lea.sflag [#allocation7], %s860
        %s862 = sand.u32 %s231, 1
        %s863 = smul.addr %s862, 16
        %s864 = scalar_lea.vmem [#allocation6], %s863
        %s865 = sand.u32 %s34, 1
        %s866 = scalar_lea.sflag [#allocation7], %s865
        %s867 = sand.u32 %s259, 1
        %s868 = smul.addr %s867, 16
        %s869 = scalar_lea.vmem [#allocation8], %s868
        %s870 = sand.u32 %s34, 1
        %s871 = scalar_lea.sflag [#allocation10], %s870
        %s872 = sand.u32 %s287, 1
        %s873 = smul.addr %s872, 8
        %s874 = scalar_lea.vmem [#allocation9], %s873
        %s875 = sand.u32 %s34, 1
        %s876 = scalar_lea.sflag [#allocation10], %s875
        %s877 = sand.u32 %s315, 1
        %s878 = smul.addr %s877, 8
        %s879 = scalar_lea.vmem [#allocation11], %s878
        // Predicated region
        $region49: #{tpu_custom_call.1} parent=43 // pred_check
          %p880 = pneg %p213
        $region50: #{tpu_custom_call.1} parent=43 // pred_check_branch
          %882 = sbr.rel (%p880) target = $region52
        $region51: #{tpu_custom_call.1} parent=43 // pred_region
          %s884 = ssub.s32 256, 256
          %885 = vsyncadd %s856, %s884
          %s886 = smul.addr %s38, 4
          %s887 = sadd.s32 %s39, %s886
          %s888 = smul.addr %s887, 64
          %s889 = scalar_lea.hbm %s6, %s888
          %s890 = sshll.u32 %s859, 4
          %s891 = int_to_ptr.vmem [resolvable:$true] %s890
          %896 = dma.vmem_to_hbm [thread:$0]  %s891, 256, %s889, %s856, 64, 64, 4
        $region52: #{tpu_custom_call.1} parent=43 // pred_fallthru
          _
        // Predicated region
        $region53: #{tpu_custom_call.1} parent=43 // pred_check
          %p897 = pneg %p241
        $region54: #{tpu_custom_call.1} parent=43 // pred_check_branch
          %899 = sbr.rel (%p897) target = $region56
        $region55: #{tpu_custom_call.1} parent=43 // pred_region
          %s901 = ssub.s32 256, 256
          %902 = vsyncadd %s861, %s901
          %s903 = smul.addr %s38, 2
          %s904 = sadd.s32 %s39, %s903
          %s905 = smul.addr %s904, 128
          %s906 = scalar_lea.hbm %s7, %s905
          %s907 = sshll.u32 %s864, 4
          %s908 = int_to_ptr.vmem [resolvable:$true] %s907
          %913 = dma.vmem_to_hbm [thread:$0]  %s908, 256, %s906, %s861, 128, 128, 8
        $region56: #{tpu_custom_call.1} parent=43 // pred_fallthru
          _
        // Predicated region
        $region57: #{tpu_custom_call.1} parent=43 // pred_check
          %p914 = pneg %p269
        $region58: #{tpu_custom_call.1} parent=43 // pred_check_branch
          %916 = sbr.rel (%p914) target = $region60
        $region59: #{tpu_custom_call.1} parent=43 // pred_region
          %s918 = ssub.s32 256, 256
          %919 = vsyncadd %s866, %s918
          %s920 = smul.addr %s38, 2
          %s921 = sadd.s32 %s39, %s920
          %s922 = smul.addr %s921, 128
          %s923 = scalar_lea.hbm %s8, %s922
          %s924 = sshll.u32 %s869, 4
          %s925 = int_to_ptr.vmem [resolvable:$true] %s924
          %930 = dma.vmem_to_hbm [thread:$0]  %s925, 256, %s923, %s866, 128, 128, 8
        $region60: #{tpu_custom_call.1} parent=43 // pred_fallthru
          _
        // Predicated region
        $region61: #{tpu_custom_call.1} parent=43 // pred_check
          %p931 = pneg %p297
        $region62: #{tpu_custom_call.1} parent=43 // pred_check_branch
          %933 = sbr.rel (%p931) target = $region64
        $region63: #{tpu_custom_call.1} parent=43 // pred_region
          %s935 = ssub.s32 128, 128
          %936 = vsyncadd %s871, %s935
          %s937 = smul.addr %s38, 2
          %s938 = sadd.s32 %s39, %s937
          %s939 = smul.addr %s938, 64
          %s940 = scalar_lea.hbm %s9, %s939
          %s941 = sshll.u32 %s874, 4
          %s942 = int_to_ptr.vmem [resolvable:$true] %s941
          %947 = dma.vmem_to_hbm [thread:$0]  %s942, 128, %s940, %s871, 64, 64, 4
        $region64: #{tpu_custom_call.1} parent=43 // pred_fallthru
          _
        // Predicated region
        $region65: #{tpu_custom_call.1} parent=43 // pred_check
          %p948 = pneg %p325
        $region66: #{tpu_custom_call.1} parent=43 // pred_check_branch
          %950 = sbr.rel (%p948) target = $region68
        $region67: #{tpu_custom_call.1} parent=43 // pred_region
          %s952 = ssub.s32 128, 128
          %953 = vsyncadd %s876, %s952
          %s954 = smul.addr %s38, 2
          %s955 = sadd.s32 %s39, %s954
          %s956 = smul.addr %s955, 64
          %s957 = scalar_lea.hbm %s10, %s956
          %s958 = sshll.u32 %s879, 4
          %s959 = int_to_ptr.vmem [resolvable:$true] %s958
          %964 = dma.vmem_to_hbm [thread:$0]  %s959, 128, %s957, %s876, 64, 64, 4
        $region68: #{tpu_custom_call.1} parent=43 // pred_fallthru
          _
      $region44: #{tpu_custom_call.1} parent=5 // pred_fallthru
        _
      %p965 = scmp.le.s32.totalorder 2, %s29
      // Predicated region
      $region69: #{tpu_custom_call.1} parent=5 // pred_check
        %p966 = pneg %p965
      $region70: #{tpu_custom_call.1} parent=5 // pred_check_branch
        %968 = sbr.rel (%p966) target = $region72
      $region71: #{tpu_custom_call.1} parent=5 // pred_region
        %s969 = ssub.s32 %s29, 2
        // Predicated region
        $region73: #{tpu_custom_call.1} parent=71 // pred_check
          %p970 = pneg %p219
        $region74: #{tpu_custom_call.1} parent=71 // pred_check_branch
          %972 = sbr.rel (%p970) target = $region76
        $region75: #{tpu_custom_call.1} parent=71 // pred_region
          %s973 = sand.u32 %s204, 1
          %s974 = scalar_lea.sflag [#allocation4], %s973
          %s975 = sand.u32 %s204, 1
          %s976 = smul.addr %s975, 16
          %s977 = scalar_lea.vmem [#allocation5], %s976
          %978 = dma.done %s974, 256
        $region76: #{tpu_custom_call.1} parent=71 // pred_fallthru
          _
        // Predicated region
        $region77: #{tpu_custom_call.1} parent=71 // pred_check
          %p979 = pneg %p247
        $region78: #{tpu_custom_call.1} parent=71 // pred_check_branch
          %981 = sbr.rel (%p979) target = $region80
        $region79: #{tpu_custom_call.1} parent=71 // pred_region
          %s982 = sand.u32 %s35, 1
          %s983 = scalar_lea.sflag [#allocation7], %s982
          %s984 = sand.u32 %s232, 1
          %s985 = smul.addr %s984, 16
          %s986 = scalar_lea.vmem [#allocation6], %s985
          %987 = dma.done %s983, 256
        $region80: #{tpu_custom_call.1} parent=71 // pred_fallthru
          _
        // Predicated region
        $region81: #{tpu_custom_call.1} parent=71 // pred_check
          %p988 = pneg %p275
        $region82: #{tpu_custom_call.1} parent=71 // pred_check_branch
          %990 = sbr.rel (%p988) target = $region84
        $region83: #{tpu_custom_call.1} parent=71 // pred_region
          %s991 = sand.u32 %s35, 1
          %s992 = scalar_lea.sflag [#allocation7], %s991
          %s993 = sand.u32 %s260, 1
          %s994 = smul.addr %s993, 16
          %s995 = scalar_lea.vmem [#allocation8], %s994
          %996 = dma.done %s992, 256
        $region84: #{tpu_custom_call.1} parent=71 // pred_fallthru
          _
        // Predicated region
        $region85: #{tpu_custom_call.1} parent=71 // pred_check
          %p997 = pneg %p303
        $region86: #{tpu_custom_call.1} parent=71 // pred_check_branch
          %999 = sbr.rel (%p997) target = $region88
        $region87: #{tpu_custom_call.1} parent=71 // pred_region
          %s1000 = sand.u32 %s35, 1
          %s1001 = scalar_lea.sflag [#allocation10], %s1000
          %s1002 = sand.u32 %s288, 1
          %s1003 = smul.addr %s1002, 8
          %s1004 = scalar_lea.vmem [#allocation9], %s1003
          %1005 = dma.done %s1001, 128
        $region88: #{tpu_custom_call.1} parent=71 // pred_fallthru
          _
        // Predicated region
        $region89: #{tpu_custom_call.1} parent=71 // pred_check
          %p1006 = pneg %p331
        $region90: #{tpu_custom_call.1} parent=71 // pred_check_branch
          %1008 = sbr.rel (%p1006) target = $region92
        $region91: #{tpu_custom_call.1} parent=71 // pred_region
          %s1009 = sand.u32 %s35, 1
          %s1010 = scalar_lea.sflag [#allocation10], %s1009
          %s1011 = sand.u32 %s316, 1
          %s1012 = smul.addr %s1011, 8
          %s1013 = scalar_lea.vmem [#allocation11], %s1012
          %1014 = dma.done %s1010, 128
        $region92: #{tpu_custom_call.1} parent=71 // pred_fallthru
          _
      $region72: #{tpu_custom_call.1} parent=5 // pred_fallthru
        _
    $region6: #{tpu_custom_call.1} parent=1 // loop_footer
      %s33 = sadd.s32 1, %s29
    $region7: #{tpu_custom_call.1} parent=1 // loop_footer_branch
      %28 = sbr.rel target = $region3
    $region8: #{tpu_custom_call.1} parent=1 // loop_exit
      _
    %1015 = vsyncpa [#allocation3], 1
    %s1016 = scalar_lea.sflag [#allocation3], 1
    %1017 = vsyncpa %s1016, 1
    %1018 = vsyncpa [#allocation4], 1
    %s1019 = scalar_lea.sflag [#allocation4], 1
    %1020 = vsyncpa %s1019, 1
    %1021 = vsyncpa [#allocation7], 1
    %s1022 = scalar_lea.sflag [#allocation7], 1
    %1023 = vsyncpa %s1022, 1
    %1024 = vsyncpa [#allocation10], 1
    %s1025 = scalar_lea.sflag [#allocation10], 1
    %1026 = vsyncpa %s1025, 1

</llo_original>
